<compile_context>
chip_gen: v7x
topology: tpu7x:2x2x1
jax: 0.10.0
libtpu: 0.0.40
codegen_flags: <defaults>
</compile_context>

<pallas_src>
import jax
import jax.numpy as jnp
import numpy as np
from jax.experimental import pallas as pl
from jax.experimental.pallas import tpu as pltpu


def _flash_out_kernel(q_ref, k_ref, v_ref, wo_ref, bo_ref, o_ref,
                      m_sc, l_sc, acc_sc, out_sc):
    h = pl.program_id(2)
    kv = pl.program_id(3)
    h_last = pl.num_programs(2) - 1
    kv_last = pl.num_programs(3) - 1

    # Reset online-softmax state at the start of every (batch, q-tile, head).
    @pl.when(kv == 0)
    def _init_head_state():
        m_sc[...] = jnp.full_like(m_sc, -jnp.inf)
        l_sc[...] = jnp.zeros_like(l_sc)
        acc_sc[...] = jnp.zeros_like(acc_sc)

    # Reset the output-conv accumulator at the start of every (batch, q-tile).
    @pl.when(jnp.logical_and(kv == 0, h == 0))
    def _init_out_acc():
        out_sc[...] = jnp.zeros_like(out_sc)

    q = q_ref[0, 0]                      # (tq, Dh)  bf16, attention scale folded in
    k = k_ref[0, 0]                      # (Dh, tk)  bf16
    v = v_ref[0, 0]                      # (tk, Dh)  bf16

    # Scores for this (q-tile, kv-tile): bf16 operands, f32 accumulation.
    s = jnp.dot(q, k, preferred_element_type=jnp.float32)       # (tq, tk)

    # Online softmax with unnormalized probabilities (single rescale at the end).
    m_prev = m_sc[...]
    m_new = jnp.maximum(m_prev, jnp.max(s, axis=-1, keepdims=True))   # (tq, 1)
    p = jnp.exp(s - m_new)                                            # (tq, tk)
    alpha = jnp.exp(m_prev - m_new)                                   # (tq, 1)
    l_sc[...] = alpha * l_sc[...] + jnp.sum(p, axis=-1, keepdims=True)
    acc_sc[...] = alpha * acc_sc[...] + jnp.dot(
        p.astype(jnp.bfloat16), v, preferred_element_type=jnp.float32)  # (tq, Dh)
    m_sc[...] = m_new

    # Last kv tile: normalize once, fold this head into the output 1x1 conv.
    @pl.when(kv == kv_last)
    def _head_out():
        out_h = acc_sc[...] / l_sc[...]                            # (tq, Dh) f32
        out_sc[...] += jnp.dot(out_h.astype(jnp.bfloat16), wo_ref[h],
                               preferred_element_type=jnp.float32)  # (tq, cq_pad)

    # Last head, last kv: single write of the lane-dense output block (+ bias).
    @pl.when(jnp.logical_and(kv == kv_last, h == h_last))
    def _write_out():
        o_ref[0] = (out_sc[...] + bo_ref[...]).astype(o_ref.dtype)


def _pick_tile(n, target):
    """Largest multiple of 128 <= target that divides n, else n itself."""
    if n <= target:
        return n
    t = (target // 128) * 128
    while t >= 128:
        if n % t == 0:
            return t
        t -= 128
    return n


def cross_attention_pallas(x, params, *, heads, dim_head, context=None,
                           q_tile=512, kv_tile=1024):
    b, cq, hh, ww = x.shape
    n = hh * ww
    inner = heads * dim_head
    scale = dim_head ** (-0.5)

    x_nc = jnp.transpose(x.reshape(b, cq, n), (0, 2, 1))         # (b, n, cq)

    # 1x1-conv projections as plain matmuls (once per batch, in XLA).
    def proj(inp, w, bias):                                      # inp (b, m, c)
        return jnp.einsum('bmc,oc->bmo', inp, w,
                          preferred_element_type=jnp.float32) + bias

    q = proj(x_nc, params['wq'], params['bq']) * scale           # (b, n, inner)
    if context is None:
        k = proj(x_nc, params['wk'], params['bk'])               # (b, n, inner)
        v = proj(x_nc, params['wv'], params['bv'])
    else:
        # Module broadcasts the (b, cc) context to every pixel; project the tiny
        # vector once, broadcast the projected K/V (never the raw context).
        k1 = proj(context[:, None, :], params['wk'], params['bk'])   # (b, 1, inner)
        v1 = proj(context[:, None, :], params['wv'], params['bv'])
        k = jnp.broadcast_to(k1, (b, n, inner))
        v = jnp.broadcast_to(v1, (b, n, inner))

    # MXU-friendly per-head bf16 layouts.
    q_h = q.reshape(b, n, heads, dim_head).transpose(0, 2, 1, 3).astype(jnp.bfloat16)  # (b,H,N,Dh)
    k_h = k.reshape(b, n, heads, dim_head).transpose(0, 2, 3, 1).astype(jnp.bfloat16)  # (b,H,Dh,N)
    v_h = v.reshape(b, n, heads, dim_head).transpose(0, 2, 1, 3).astype(jnp.bfloat16)  # (b,H,N,Dh)

    # Output 1x1-conv weights, per-head, zero-padded to a lane-dense width.
    cq_pad = ((cq + 127) // 128) * 128
    wo_h = params['wo'].reshape(cq, heads, dim_head).transpose(1, 2, 0)      # (H, Dh, cq)
    wo_h = jnp.pad(wo_h, ((0, 0), (0, 0), (0, cq_pad - cq))).astype(jnp.bfloat16)
    bo = jnp.pad(params['bo'], (0, cq_pad - cq)).reshape(1, cq_pad).astype(jnp.float32)

    tq = _pick_tile(n, q_tile)
    tk = _pick_tile(n, kv_tile)
    grid = (b, n // tq, heads, n // tk)

    cost = pl.CostEstimate(
        flops=int(4 * b * heads * n * n * dim_head            # QK^T + PV
                  + 2 * b * n * inner * cq_pad),               # output 1x1 conv
        transcendentals=int(b * heads * n * n),
        bytes_accessed=int(2 * b * heads * n * dim_head * (1 + 2 * (n // tq))
                           + 4 * b * n * cq_pad
                           + 2 * heads * dim_head * cq_pad),
    )

    out_pad = pl.pallas_call(
        _flash_out_kernel,
        out_shape=jax.ShapeDtypeStruct((b, n, cq_pad), jnp.float32),
        grid_spec=pltpu.PrefetchScalarGridSpec(
            num_scalar_prefetch=0,
            grid=grid,
            in_specs=[
                pl.BlockSpec((1, 1, tq, dim_head), lambda ib, qi, h, kv: (ib, h, qi, 0)),  # q
                pl.BlockSpec((1, 1, dim_head, tk), lambda ib, qi, h, kv: (ib, h, 0, kv)),  # k
                pl.BlockSpec((1, 1, tk, dim_head), lambda ib, qi, h, kv: (ib, h, kv, 0)),  # v
                pl.BlockSpec((heads, dim_head, cq_pad), lambda ib, qi, h, kv: (0, 0, 0)),  # wo (resident)
                pl.BlockSpec((1, cq_pad), lambda ib, qi, h, kv: (0, 0)),                   # bo (resident)
            ],
            out_specs=pl.BlockSpec((1, tq, cq_pad), lambda ib, qi, h, kv: (ib, qi, 0)),
            scratch_shapes=[
                pltpu.VMEM((tq, 1), jnp.float32),            # running max
                pltpu.VMEM((tq, 1), jnp.float32),            # running denominator
                pltpu.VMEM((tq, dim_head), jnp.float32),     # unnormalized head output
                pltpu.VMEM((tq, cq_pad), jnp.float32),       # output-conv accumulator
            ],
        ),
        compiler_params=pltpu.CompilerParams(
            dimension_semantics=("parallel", "parallel", "arbitrary", "arbitrary"),
            vmem_limit_bytes=32 * 1024 * 1024,
        ),
        cost_estimate=cost,
    )(q_h, k_h, v_h, wo_h, bo)

    out = out_pad[:, :, :cq]                                  # drop lane padding
    return jnp.transpose(out, (0, 2, 1)).reshape(b, cq, hh, ww)


def cross_attention_ref(x, params, *, heads, dim_head, context=None):
    """Pure-JAX f32 reference mirroring the PyTorch forward pass."""
    b, cq, h, w = x.shape
    n = h * w
    scale = dim_head ** (-0.5)
    xf = x.reshape(b, cq, n)
    ctxf = xf if context is None else jnp.broadcast_to(
        context[:, :, None], (b, context.shape[1], n))
    q = jnp.einsum('oc,bcn->bon', params['wq'], xf) + params['bq'][None, :, None]
    k = jnp.einsum('oc,bcn->bon', params['wk'], ctxf) + params['bk'][None, :, None]
    v = jnp.einsum('oc,bcn->bon', params['wv'], ctxf) + params['bv'][None, :, None]
    q = q.reshape(b, heads, dim_head, n) * scale
    k = k.reshape(b, heads, dim_head, n)
    v = v.reshape(b, heads, dim_head, n)
    sim = jnp.einsum('bhdi,bhdj->bhij', q, k)
    attn = jax.nn.softmax(sim, axis=-1)
    out = jnp.einsum('bhij,bhdj->bhid', attn, v)                     # (b, h, n, d)
    out = out.transpose(0, 1, 3, 2).reshape(b, heads * dim_head, n)  # b (h d) n
    out = jnp.einsum('oc,bcn->bon', params['wo'], out) + params['bo'][None, :, None]
    return out.reshape(b, cq, h, w)


if __name__ == "__main__":
    b, query_dim, h, w = 2, 4, 16, 16
    heads, dim_head = 2, 16
    inner_dim = heads * dim_head

    key = jax.random.PRNGKey(0)
    ks = jax.random.split(key, 9)

    def init(k, shape, fan_in):
        bound = 1.0 / np.sqrt(fan_in)
        return jax.random.uniform(k, shape, jnp.float32, -bound, bound)

    params = dict(
        wq=init(ks[0], (inner_dim, query_dim), query_dim),
        bq=init(ks[1], (inner_dim,), query_dim),
        wk=init(ks[2], (inner_dim, query_dim), query_dim),
        bk=init(ks[3], (inner_dim,), query_dim),
        wv=init(ks[4], (inner_dim, query_dim), query_dim),
        bv=init(ks[5], (inner_dim,), query_dim),
        wo=init(ks[6], (query_dim, inner_dim), inner_dim),
        bo=init(ks[7], (query_dim,), inner_dim),
    )
    x = jax.random.normal(ks[8], (b, query_dim, h, w), jnp.float32)

    # 128-wide tiles -> 2 batches x 2 q-tiles x 2 heads x 2 kv-tiles, exercising
    # the online-softmax, head-accumulation and single-write output paths.
    out = cross_attention_pallas(x, params, heads=heads, dim_head=dim_head,
                                 q_tile=128, kv_tile=128)
    out = jax.block_until_ready(out)

    ref = cross_attention_ref(x, params, heads=heads, dim_head=dim_head)
    # bf16 MXU operands in the big matmuls -> loosened tolerance vs f32 ref.
    np.testing.assert_allclose(np.asarray(out), np.asarray(ref), rtol=5e-2, atol=5e-2)
    print("KERNEL_OK")
</pallas_src>

<mosaic_0001>
module attributes {stable_mosaic.version = 11 : i64} {
  func.func @_flash_out_kernel(%arg0: i32, %arg1: i32, %arg2: i32, %arg3: i32, %arg4: memref<1x1x128x16xbf16, #tpu.memory_space<vmem>>, %arg5: memref<1x1x16x128xbf16, #tpu.memory_space<vmem>>, %arg6: memref<1x1x128x16xbf16, #tpu.memory_space<vmem>>, %arg7: memref<2x16x128xbf16, #tpu.memory_space<vmem>>, %arg8: memref<1x128xf32, #tpu.memory_space<vmem>>, %arg9: memref<1x128x128xf32, #tpu.memory_space<vmem>>, %arg10: memref<128x1xf32, #tpu.memory_space<vmem>>, %arg11: memref<128x1xf32, #tpu.memory_space<vmem>>, %arg12: memref<128x16xf32, #tpu.memory_space<vmem>>, %arg13: memref<128x128xf32, #tpu.memory_space<vmem>>) attributes {dimension_semantics = [#tpu.dimension_semantics<parallel>, #tpu.dimension_semantics<parallel>, #tpu.dimension_semantics<arbitrary>, #tpu.dimension_semantics<arbitrary>], iteration_bounds = array<i64: 2, 2, 2, 2>, scalar_prefetch = 0 : i64, scratch_operands = 4 : i64, tpu.core_type = #tpu.core_type<tc>, window_params = [{transform_indices = @transform_0, window_bounds = array<i64: 1, 1, 128, 16>}, {transform_indices = @transform_1, window_bounds = array<i64: 1, 1, 16, 128>}, {transform_indices = @transform_2, window_bounds = array<i64: 1, 1, 128, 16>}, {pipeline_mode = #tpu.pipeline_mode<synchronous>, transform_indices = @transform_3, window_bounds = array<i64: 2, 16, 128>}, {pipeline_mode = #tpu.pipeline_mode<synchronous>, transform_indices = @transform_4, window_bounds = array<i64: 1, 128>}, {transform_indices = @transform_5, window_bounds = array<i64: 1, 128, 128>}]} {
    %c0_i32 = arith.constant 0 : i32
    %0 = arith.cmpi eq, %arg3, %c0_i32 : i32
    %1 = arith.extui %0 : i1 to i32
    %c0_i32_0 = arith.constant 0 : i32
    %2 = arith.cmpi ne, %1, %c0_i32_0 : i32
    scf.if %2 {
      %cst_34 = arith.constant 0xFF800000 : f32
      %46 = vector.broadcast %cst_34 : f32 to vector<128x1xf32>
      %c0_35 = arith.constant 0 : index
      %c0_36 = arith.constant 0 : index
      %47 = vector.load %arg10[%c0_35, %c0_36] : memref<128x1xf32, #tpu.memory_space<vmem>>, vector<128x1xf32>
      tpu.vector_store %arg10[%c0_35, %c0_36], %46 {strides = array<i32>} : memref<128x1xf32, #tpu.memory_space<vmem>>, vector<128x1xf32>,
      %cst_37 = arith.constant 0.000000e+00 : f32
      %48 = vector.broadcast %cst_37 : f32 to vector<128x1xf32>
      %c0_38 = arith.constant 0 : index
      %c0_39 = arith.constant 0 : index
      %49 = vector.load %arg11[%c0_38, %c0_39] : memref<128x1xf32, #tpu.memory_space<vmem>>, vector<128x1xf32>
      tpu.vector_store %arg11[%c0_38, %c0_39], %48 {strides = array<i32>} : memref<128x1xf32, #tpu.memory_space<vmem>>, vector<128x1xf32>,
      %cst_40 = arith.constant 0.000000e+00 : f32
      %50 = vector.broadcast %cst_40 : f32 to vector<128x16xf32>
      %c0_41 = arith.constant 0 : index
      %c0_42 = arith.constant 0 : index
      %51 = vector.load %arg12[%c0_41, %c0_42] : memref<128x16xf32, #tpu.memory_space<vmem>>, vector<128x16xf32>
      tpu.vector_store %arg12[%c0_41, %c0_42], %50 {strides = array<i32>} : memref<128x16xf32, #tpu.memory_space<vmem>>, vector<128x16xf32>,
    } else {
    }
    %c0_i32_1 = arith.constant 0 : i32
    %3 = arith.cmpi eq, %arg3, %c0_i32_1 : i32
    %c0_i32_2 = arith.constant 0 : i32
    %4 = arith.cmpi eq, %arg2, %c0_i32_2 : i32
    %5 = arith.andi %3, %4 : i1
    %6 = arith.extui %5 : i1 to i32
    %c0_i32_3 = arith.constant 0 : i32
    %7 = arith.cmpi ne, %6, %c0_i32_3 : i32
    scf.if %7 {
      %cst_34 = arith.constant 0.000000e+00 : f32
      %46 = vector.broadcast %cst_34 : f32 to vector<128x128xf32>
      %c0_35 = arith.constant 0 : index
      %c0_36 = arith.constant 0 : index
      %47 = vector.load %arg13[%c0_35, %c0_36] : memref<128x128xf32, #tpu.memory_space<vmem>>, vector<128x128xf32>
      tpu.vector_store %arg13[%c0_35, %c0_36], %46 {strides = array<i32>} : memref<128x128xf32, #tpu.memory_space<vmem>>, vector<128x128xf32>,
    } else {
    }
    %c0 = arith.constant 0 : index
    %c0_4 = arith.constant 0 : index
    %c0_5 = arith.constant 0 : index
    %c0_6 = arith.constant 0 : index
    %8 = vector.load %arg4[%c0, %c0_4, %c0_5, %c0_6] : memref<1x1x128x16xbf16, #tpu.memory_space<vmem>>, vector<1x1x128x16xbf16>
    %9 = vector.shape_cast %8 : vector<1x1x128x16xbf16> to vector<128x16xbf16>
    %c0_7 = arith.constant 0 : index
    %c0_8 = arith.constant 0 : index
    %c0_9 = arith.constant 0 : index
    %c0_10 = arith.constant 0 : index
    %10 = vector.load %arg5[%c0_7, %c0_8, %c0_9, %c0_10] : memref<1x1x16x128xbf16, #tpu.memory_space<vmem>>, vector<1x1x16x128xbf16>
    %11 = vector.shape_cast %10 : vector<1x1x16x128xbf16> to vector<16x128xbf16>
    %c0_11 = arith.constant 0 : index
    %c0_12 = arith.constant 0 : index
    %c0_13 = arith.constant 0 : index
    %c0_14 = arith.constant 0 : index
    %12 = vector.load %arg6[%c0_11, %c0_12, %c0_13, %c0_14] : memref<1x1x128x16xbf16, #tpu.memory_space<vmem>>, vector<1x1x128x16xbf16>
    %13 = vector.shape_cast %12 : vector<1x1x128x16xbf16> to vector<128x16xbf16>
    %cst = arith.constant dense<0.000000e+00> : vector<128x128xf32>
    %14 = tpu.matmul %9, %11, %cst {dimension_numbers = #tpu.dot_dimension_numbers<[1], [0], [0], [1], [0, 0, 1, 1], [], []>} : vector<128x16xbf16>, vector<16x128xbf16>, vector<128x128xf32> -> vector<128x128xf32>
    %c0_15 = arith.constant 0 : index
    %c0_16 = arith.constant 0 : index
    %15 = vector.load %arg10[%c0_15, %c0_16] : memref<128x1xf32, #tpu.memory_space<vmem>>, vector<128x1xf32>
    %cst_17 = arith.constant dense<0xFF800000> : vector<128xf32>
    %16 = vector.multi_reduction <maximumf>, %14, %cst_17 [1] : vector<128x128xf32> to vector<128xf32>
    %17 = vector.shape_cast %16 : vector<128xf32> to vector<128x1xf32>
    %18 = arith.maximumf %15, %17 : vector<128x1xf32>
    %19 = vector.broadcast %18 : vector<128x1xf32> to vector<128x128xf32>
    %20 = arith.subf %14, %19 : vector<128x128xf32>
    %21 = math.exp %20 : vector<128x128xf32>
    %22 = arith.subf %15, %18 : vector<128x1xf32>
    %23 = math.exp %22 : vector<128x1xf32>
    %c0_18 = arith.constant 0 : index
    %c0_19 = arith.constant 0 : index
    %24 = vector.load %arg11[%c0_18, %c0_19] : memref<128x1xf32, #tpu.memory_space<vmem>>, vector<128x1xf32>
    %25 = arith.mulf %23, %24 : vector<128x1xf32>
    %cst_20 = arith.constant dense<0.000000e+00> : vector<128xf32>
    %26 = vector.multi_reduction <add>, %21, %cst_20 [1] : vector<128x128xf32> to vector<128xf32>
    %27 = vector.shape_cast %26 : vector<128xf32> to vector<128x1xf32>
    %28 = arith.addf %25, %27 : vector<128x1xf32>
    %c0_21 = arith.constant 0 : index
    %c0_22 = arith.constant 0 : index
    %29 = vector.load %arg11[%c0_21, %c0_22] : memref<128x1xf32, #tpu.memory_space<vmem>>, vector<128x1xf32>
    tpu.vector_store %arg11[%c0_21, %c0_22], %28 {strides = array<i32>} : memref<128x1xf32, #tpu.memory_space<vmem>>, vector<128x1xf32>,
    %c0_23 = arith.constant 0 : index
    %c0_24 = arith.constant 0 : index
    %30 = vector.load %arg12[%c0_23, %c0_24] : memref<128x16xf32, #tpu.memory_space<vmem>>, vector<128x16xf32>
    %31 = vector.broadcast %23 : vector<128x1xf32> to vector<128x16xf32>
    %32 = arith.mulf %31, %30 : vector<128x16xf32>
    %33 = arith.truncf %21 : vector<128x128xf32> to vector<128x128xbf16>
    %cst_25 = arith.constant dense<0.000000e+00> : vector<128x16xf32>
    %34 = tpu.matmul %33, %13, %cst_25 {dimension_numbers = #tpu.dot_dimension_numbers<[1], [0], [0], [1], [0, 0, 1, 1], [], []>} : vector<128x128xbf16>, vector<128x16xbf16>, vector<128x16xf32> -> vector<128x16xf32>
    %35 = arith.addf %32, %34 : vector<128x16xf32>
    %c0_26 = arith.constant 0 : index
    %c0_27 = arith.constant 0 : index
    %36 = vector.load %arg12[%c0_26, %c0_27] : memref<128x16xf32, #tpu.memory_space<vmem>>, vector<128x16xf32>
    tpu.vector_store %arg12[%c0_26, %c0_27], %35 {strides = array<i32>} : memref<128x16xf32, #tpu.memory_space<vmem>>, vector<128x16xf32>,
    %c0_28 = arith.constant 0 : index
    %c0_29 = arith.constant 0 : index
    %37 = vector.load %arg10[%c0_28, %c0_29] : memref<128x1xf32, #tpu.memory_space<vmem>>, vector<128x1xf32>
    tpu.vector_store %arg10[%c0_28, %c0_29], %18 {strides = array<i32>} : memref<128x1xf32, #tpu.memory_space<vmem>>, vector<128x1xf32>,
    %c1_i32 = arith.constant 1 : i32
    %38 = arith.cmpi eq, %arg3, %c1_i32 : i32
    %39 = arith.extui %38 : i1 to i32
    %c0_i32_30 = arith.constant 0 : i32
    %40 = arith.cmpi ne, %39, %c0_i32_30 : i32
    scf.if %40 {
      %c0_34 = arith.constant 0 : index
      %c0_35 = arith.constant 0 : index
      %46 = vector.load %arg12[%c0_34, %c0_35] : memref<128x16xf32, #tpu.memory_space<vmem>>, vector<128x16xf32>
      %c0_36 = arith.constant 0 : index
      %c0_37 = arith.constant 0 : index
      %47 = vector.load %arg11[%c0_36, %c0_37] : memref<128x1xf32, #tpu.memory_space<vmem>>, vector<128x1xf32>
      %48 = vector.broadcast %47 : vector<128x1xf32> to vector<128x16xf32>
      %49 = arith.divf %46, %48 : vector<128x16xf32>
      %c0_38 = arith.constant 0 : index
      %c0_39 = arith.constant 0 : index
      %50 = vector.load %arg13[%c0_38, %c0_39] : memref<128x128xf32, #tpu.memory_space<vmem>>, vector<128x128xf32>
      %51 = arith.truncf %49 : vector<128x16xf32> to vector<128x16xbf16>
      %52 = arith.index_cast %arg2 : i32 to index
      %c0_40 = arith.constant 0 : index
      %c0_41 = arith.constant 0 : index
      %53 = vector.load %arg7[%52, %c0_40, %c0_41] : memref<2x16x128xbf16, #tpu.memory_space<vmem>>, vector<1x16x128xbf16>
      %54 = vector.shape_cast %53 : vector<1x16x128xbf16> to vector<16x128xbf16>
      %cst_42 = arith.constant dense<0.000000e+00> : vector<128x128xf32>
      %55 = tpu.matmul %51, %54, %cst_42 {dimension_numbers = #tpu.dot_dimension_numbers<[1], [0], [0], [1], [0, 0, 1, 1], [], []>} : vector<128x16xbf16>, vector<16x128xbf16>, vector<128x128xf32> -> vector<128x128xf32>
      %56 = arith.addf %50, %55 : vector<128x128xf32>
      %c0_43 = arith.constant 0 : index
      %c0_44 = arith.constant 0 : index
      %57 = vector.load %arg13[%c0_43, %c0_44] : memref<128x128xf32, #tpu.memory_space<vmem>>, vector<128x128xf32>
      tpu.vector_store %arg13[%c0_43, %c0_44], %56 {strides = array<i32>} : memref<128x128xf32, #tpu.memory_space<vmem>>, vector<128x128xf32>,
    } else {
    }
    %c1_i32_31 = arith.constant 1 : i32
    %41 = arith.cmpi eq, %arg3, %c1_i32_31 : i32
    %c1_i32_32 = arith.constant 1 : i32
    %42 = arith.cmpi eq, %arg2, %c1_i32_32 : i32
    %43 = arith.andi %41, %42 : i1
    %44 = arith.extui %43 : i1 to i32
    %c0_i32_33 = arith.constant 0 : i32
    %45 = arith.cmpi ne, %44, %c0_i32_33 : i32
    scf.if %45 {
      %c0_34 = arith.constant 0 : index
      %c0_35 = arith.constant 0 : index
      %46 = vector.load %arg13[%c0_34, %c0_35] : memref<128x128xf32, #tpu.memory_space<vmem>>, vector<128x128xf32>
      %c0_36 = arith.constant 0 : index
      %c0_37 = arith.constant 0 : index
      %47 = vector.load %arg8[%c0_36, %c0_37] : memref<1x128xf32, #tpu.memory_space<vmem>>, vector<1x128xf32>
      %48 = vector.broadcast %47 : vector<1x128xf32> to vector<128x128xf32>
      %49 = arith.addf %46, %48 : vector<128x128xf32>
      %c0_38 = arith.constant 0 : index
      %c0_39 = arith.constant 0 : index
      %c0_40 = arith.constant 0 : index
      %50 = vector.load %arg9[%c0_38, %c0_39, %c0_40] : memref<1x128x128xf32, #tpu.memory_space<vmem>>, vector<1x128x128xf32>
      %51 = vector.shape_cast %50 : vector<1x128x128xf32> to vector<128x128xf32>
      %52 = vector.shape_cast %49 : vector<128x128xf32> to vector<1x128x128xf32>
      tpu.vector_store %arg9[%c0_38, %c0_39, %c0_40], %52 {strides = array<i32>} : memref<1x128x128xf32, #tpu.memory_space<vmem>>, vector<1x128x128xf32>,
    } else {
    }
    return
  }
  func.func @transform_0(%arg0: i32, %arg1: i32, %arg2: i32, %arg3: i32) -> (i32, i32, i32, i32) {
    %c0_i32 = arith.constant 0 : i32
    %c0_i32_0 = arith.constant 0 : i32
    return %arg0, %arg2, %arg1, %c0_i32 : i32, i32, i32, i32
  }
  func.func @transform_1(%arg0: i32, %arg1: i32, %arg2: i32, %arg3: i32) -> (i32, i32, i32, i32) {
    %c0_i32 = arith.constant 0 : i32
    %c0_i32_0 = arith.constant 0 : i32
    return %arg0, %arg2, %c0_i32, %arg3 : i32, i32, i32, i32
  }
  func.func @transform_2(%arg0: i32, %arg1: i32, %arg2: i32, %arg3: i32) -> (i32, i32, i32, i32) {
    %c0_i32 = arith.constant 0 : i32
    %c0_i32_0 = arith.constant 0 : i32
    return %arg0, %arg2, %arg3, %c0_i32 : i32, i32, i32, i32
  }
  func.func @transform_3(%arg0: i32, %arg1: i32, %arg2: i32, %arg3: i32) -> (i32, i32, i32) {
    %c0_i32 = arith.constant 0 : i32
    %c0_i32_0 = arith.constant 0 : i32
    %c0_i32_1 = arith.constant 0 : i32
    %c0_i32_2 = arith.constant 0 : i32
    return %c0_i32, %c0_i32_0, %c0_i32_1 : i32, i32, i32
  }
  func.func @transform_4(%arg0: i32, %arg1: i32, %arg2: i32, %arg3: i32) -> (i32, i32) {
    %c0_i32 = arith.constant 0 : i32
    %c0_i32_0 = arith.constant 0 : i32
    %c0_i32_1 = arith.constant 0 : i32
    return %c0_i32, %c0_i32_0 : i32, i32
  }
  func.func @transform_5(%arg0: i32, %arg1: i32, %arg2: i32, %arg3: i32) -> (i32, i32, i32) {
    %c0_i32 = arith.constant 0 : i32
    %c0_i32_0 = arith.constant 0 : i32
    return %arg0, %arg1, %c0_i32 : i32, i32, i32
  }
}

</mosaic_0001>

<llo_original>
// kernel: tpu_custom_call.1
$region0: #{tpu_custom_call.1}
  #allocation0 [shape = 'u32[]', space=smem, size = 0x4, offset = 0x4, fixed_abs, tag = 'smem constant byte address 0x4 - core index']
  #allocation1 [shape = 'u32[144,128]{1,0:T(1,128)}', space=vmem, size = 0x12000, scoped, tag = 'internal scratch']
  #allocation2 [shape = 'f32[128,1]{1,0:T(8,128)}', space=vmem, size = 0x10000, scoped, tag = 'scratch operand']
  #allocation3 [shape = 'f32[128,1]{1,0:T(8,128)}', space=vmem, size = 0x10000, scoped, tag = 'scratch operand']
  #allocation4 [shape = 'f32[128,16]{1,0:T(8,128)}', space=vmem, size = 0x10000, scoped, tag = 'scratch operand']
  #allocation5 [shape = 'f32[128,128]{1,0:T(8,128)}', space=vmem, size = 0x10000, scoped, tag = 'scratch operand']
  %s0 = inlined_call_operand.vmem [shape: bf16[2,2,256,16], index: 0, kind: input, shape index: {}]
  %s1 = inlined_call_operand.vmem [shape: bf16[2,2,16,256], index: 1, kind: input, shape index: {}]
  %s2 = inlined_call_operand.vmem [shape: bf16[2,2,256,16], index: 2, kind: input, shape index: {}]
  %s3 = inlined_call_operand.vmem [shape: bf16[2,16,128], index: 3, kind: input, shape index: {}]
  %s4 = inlined_call_operand.vmem [shape: f32[1,128], index: 4, kind: input, shape index: {}]
  %s5 = inlined_call_operand.hbm [shape: f32[2,256,128], index: 5, kind: output, shape index: {}]
  %s6 = sld [smem:[#allocation0]]
  $region110: #{tpu_custom_call.1} parent=0
    _
  %s8 = ssub.s32 1, %s6
  %s9 = scalar_select 0, %s8, %s6
  $region1: #{tpu_custom_call.1} parent=0
    #allocation6 [shape = 'u8[8192]{0}', space=vmem, size = 0x2000, scoped, tag = 'input window, operand 1']
    #allocation7 [shape = 'u8[131072]{0}', space=vmem, size = 0x20000, scoped, tag = 'output window, operand 0']
    #allocation8 [shape = 's32[2]{0}', space=sflag, size = 0x8, scoped, tag = 'scoped memory for tpu_custom_call.1']
    %10 = vsyncpa [#allocation8], 0
    %s11 = scalar_lea.sflag [#allocation8], 1
    %12 = vsyncpa %s11, 0
    loop: start=0, step=1, limit=18
    $region2: #{tpu_custom_call.1} parent=1 // loop_pre_header
      _
    $region3: #{tpu_custom_call.1} parent=1 // loop_header
      %s14 = sphi 0, %s18
      %p15 = scmp.ge.s32.totalorder %s14, 18
      %s21 = sphi 0, %s47
      %s22 = sphi 0, %s43
      %s23 = sphi 0, %s39
      %s24 = sphi 0, %s35
      %s25 = sphi 0, %s21
      %s26 = sphi 0, %s22
      %s27 = sphi 0, %s23
      %s28 = sphi 0, %s24
      %s29 = sphi 0, %s25
      %s30 = sphi 0, %s26
      %s31 = sphi 0, %s27
      %s32 = sphi 0, %s28
      %s54 = sphi 0, %s56
      %s57 = sphi 0, %s54
      %s58 = sphi 0, %s57
      %s74 = sphi 0, %s58
      %s84 = sphi 0, %s86
      %s87 = sphi 0, %s84
      %s88 = sphi 0, %s87
      %s104 = sphi 0, %s88
      %s114 = sphi 0, %s116
      %s117 = sphi 0, %s114
      %s118 = sphi 0, %s117
      %s134 = sphi 0, %s118
      %s138 = sphi 0, %s138
      %s140 = sphi 0, %s138
      %s141 = sphi 0, %s140
      %s155 = sphi 0, %s141
      %s159 = sphi 0, %s159
      %s161 = sphi 0, %s159
      %s162 = sphi 0, %s161
      %s176 = sphi 0, %s162
      %s184 = sphi 0, %s186
      %s187 = sphi 0, %s184
      %s188 = sphi 0, %s187
      %s204 = sphi 0, %s188
    $region4: #{tpu_custom_call.1} parent=1 // loop_header_branch
      %17 = sbr.rel (%p15) target = $region8
    $region5: #{tpu_custom_call.1} parent=1 // loop_body
      %s19 = ssub.s32 %s14, 1
      %s20 = ssub.s32 %s14, 2
      %s33 = sadd.s32 1, %s24
      %p34 = scmp.ge.s32.totalorder %s33, 2
      %s35 = scalar_select %p34, 0, %s33
      %s36 = sadd.s32 1, %s23
      %s37 = scalar_select %p34, %s36, %s23
      %p38 = scmp.ge.s32.totalorder %s37, 2
      %s39 = scalar_select %p38, 0, %s37
      %s40 = sadd.s32 1, %s22
      %s41 = scalar_select %p38, %s40, %s22
      %p42 = scmp.ge.s32.totalorder %s41, 2
      %s43 = scalar_select %p42, 0, %s41
      %s44 = sadd.s32 1, %s21
      %s45 = scalar_select %p42, %s44, %s21
      %p46 = scmp.ge.s32.totalorder %s45, 2
      %s47 = scalar_select %p46, 0, %s45
      %s48 = ssub.s32 %s21, %s47
      %s49 = ssub.s32 %s23, %s39
      %s50 = sor.u32 %s48, %s49
      %s51 = ssub.s32 %s22, %s43
      %s52 = sor.u32 %s50, %s51
      %p53 = scmp.eq.s32.totalorder %s52, 0
      %s55 = sadd.s32 %s54, 1
      %s56 = scalar_select %p53, %s54, %s55
      %p59 = pneg %p53
      %p60 = scmp.eq.s32.totalorder %s14, 15
      %p61 = por %p59, %p60
      %p62 = scmp.ne.s32.totalorder %s54, %s57
      %p63 = scmp.eq.s32.totalorder %s14, 0
      %p64 = por %p62, %p63
      %p65 = scmp.ne.s32.totalorder %s54, %s57
      %p66 = scmp.eq.s32.totalorder %s19, 15
      %p67 = por %p65, %p66
      %p68 = scmp.ne.s32.totalorder %s57, %s58
      %p69 = scmp.eq.s32.totalorder %s19, 0
      %p70 = por %p68, %p69
      %p71 = scmp.ne.s32.totalorder %s57, %s58
      %p72 = scmp.eq.s32.totalorder %s20, 15
      %p73 = por %p71, %p72
      %p75 = scmp.ne.s32.totalorder %s58, %s74
      %p76 = scmp.eq.s32.totalorder %s20, 0
      %p77 = por %p75, %p76
      %s78 = ssub.s32 %s21, %s47
      %s79 = ssub.s32 %s23, %s39
      %s80 = sor.u32 %s78, %s79
      %s81 = ssub.s32 %s24, %s35
      %s82 = sor.u32 %s80, %s81
      %p83 = scmp.eq.s32.totalorder %s82, 0
      %s85 = sadd.s32 %s84, 1
      %s86 = scalar_select %p83, %s84, %s85
      %p89 = pneg %p83
      %p90 = scmp.eq.s32.totalorder %s14, 15
      %p91 = por %p89, %p90
      %p92 = scmp.ne.s32.totalorder %s84, %s87
      %p93 = scmp.eq.s32.totalorder %s14, 0
      %p94 = por %p92, %p93
      %p95 = scmp.ne.s32.totalorder %s84, %s87
      %p96 = scmp.eq.s32.totalorder %s19, 15
      %p97 = por %p95, %p96
      %p98 = scmp.ne.s32.totalorder %s87, %s88
      %p99 = scmp.eq.s32.totalorder %s19, 0
      %p100 = por %p98, %p99
      %p101 = scmp.ne.s32.totalorder %s87, %s88
      %p102 = scmp.eq.s32.totalorder %s20, 15
      %p103 = por %p101, %p102
      %p105 = scmp.ne.s32.totalorder %s88, %s104
      %p106 = scmp.eq.s32.totalorder %s20, 0
      %p107 = por %p105, %p106
      %s108 = ssub.s32 %s21, %s47
      %s109 = ssub.s32 %s23, %s39
      %s110 = sor.u32 %s108, %s109
      %s111 = ssub.s32 %s24, %s35
      %s112 = sor.u32 %s110, %s111
      %p113 = scmp.eq.s32.totalorder %s112, 0
      %s115 = sadd.s32 %s114, 1
      %s116 = scalar_select %p113, %s114, %s115
      %p119 = pneg %p113
      %p120 = scmp.eq.s32.totalorder %s14, 15
      %p121 = por %p119, %p120
      %p122 = scmp.ne.s32.totalorder %s114, %s117
      %p123 = scmp.eq.s32.totalorder %s14, 0
      %p124 = por %p122, %p123
      %p125 = scmp.ne.s32.totalorder %s114, %s117
      %p126 = scmp.eq.s32.totalorder %s19, 15
      %p127 = por %p125, %p126
      %p128 = scmp.ne.s32.totalorder %s117, %s118
      %p129 = scmp.eq.s32.totalorder %s19, 0
      %p130 = por %p128, %p129
      %p131 = scmp.ne.s32.totalorder %s117, %s118
      %p132 = scmp.eq.s32.totalorder %s20, 15
      %p133 = por %p131, %p132
      %p135 = scmp.ne.s32.totalorder %s118, %s134
      %p136 = scmp.eq.s32.totalorder %s20, 0
      %p137 = por %p135, %p136
      %s139 = sadd.s32 %s138, 1
      %p142 = scmp.eq.s32.totalorder %s14, 15
      %p143 = scmp.ne.s32.totalorder %s138, %s140
      %p144 = scmp.eq.s32.totalorder %s14, 0
      %p145 = por %p143, %p144
      %p146 = scmp.ne.s32.totalorder %s138, %s140
      %p147 = scmp.eq.s32.totalorder %s19, 15
      %p148 = por %p146, %p147
      %p149 = scmp.ne.s32.totalorder %s140, %s141
      %p150 = scmp.eq.s32.totalorder %s19, 0
      %p151 = por %p149, %p150
      %p152 = scmp.ne.s32.totalorder %s140, %s141
      %p153 = scmp.eq.s32.totalorder %s20, 15
      %p154 = por %p152, %p153
      %p156 = scmp.ne.s32.totalorder %s141, %s155
      %p157 = scmp.eq.s32.totalorder %s20, 0
      %p158 = por %p156, %p157
      %s160 = sadd.s32 %s159, 1
      %p163 = scmp.eq.s32.totalorder %s14, 15
      %p164 = scmp.ne.s32.totalorder %s159, %s161
      %p165 = scmp.eq.s32.totalorder %s14, 0
      %p166 = por %p164, %p165
      %p167 = scmp.ne.s32.totalorder %s159, %s161
      %p168 = scmp.eq.s32.totalorder %s19, 15
      %p169 = por %p167, %p168
      %p170 = scmp.ne.s32.totalorder %s161, %s162
      %p171 = scmp.eq.s32.totalorder %s19, 0
      %p172 = por %p170, %p171
      %p173 = scmp.ne.s32.totalorder %s161, %s162
      %p174 = scmp.eq.s32.totalorder %s20, 15
      %p175 = por %p173, %p174
      %p177 = scmp.ne.s32.totalorder %s162, %s176
      %p178 = scmp.eq.s32.totalorder %s20, 0
      %p179 = por %p177, %p178
      %s180 = ssub.s32 %s21, %s47
      %s181 = ssub.s32 %s22, %s43
      %s182 = sor.u32 %s180, %s181
      %p183 = scmp.eq.s32.totalorder %s182, 0
      %s185 = sadd.s32 %s184, 1
      %s186 = scalar_select %p183, %s184, %s185
      %p189 = pneg %p183
      %p190 = scmp.eq.s32.totalorder %s14, 15
      %p191 = por %p189, %p190
      %p192 = scmp.ne.s32.totalorder %s184, %s187
      %p193 = scmp.eq.s32.totalorder %s14, 0
      %p194 = por %p192, %p193
      %p195 = scmp.ne.s32.totalorder %s184, %s187
      %p196 = scmp.eq.s32.totalorder %s19, 15
      %p197 = por %p195, %p196
      %p198 = scmp.ne.s32.totalorder %s187, %s188
      %p199 = scmp.eq.s32.totalorder %s19, 0
      %p200 = por %p198, %p199
      %p201 = scmp.ne.s32.totalorder %s187, %s188
      %p202 = scmp.eq.s32.totalorder %s20, 15
      %p203 = por %p201, %p202
      %p205 = scmp.ne.s32.totalorder %s188, %s204
      %p206 = scmp.eq.s32.totalorder %s20, 0
      %p207 = por %p205, %p206
      %p208 = scmp.le.s32.totalorder 1, %s14
      %p209 = scmp.lt.s32.totalorder %s14, 17
      %p210 = pnand %p208, %p209
      %p211 = pneg %p210
      // Predicated region
      $region9: #{tpu_custom_call.1} parent=5 // pred_check
        _
      $region10: #{tpu_custom_call.1} parent=5 // pred_check_branch
        %213 = sbr.rel (%p210) target = $region12
      $region11: #{tpu_custom_call.1} parent=5 // pred_region
        %s214 = ssub.s32 %s14, 1
        // Predicated region
        $region13: #{tpu_custom_call.1} parent=11 // pred_check
          %p215 = pneg %p151
        $region14: #{tpu_custom_call.1} parent=11 // pred_check_branch
          %217 = sbr.rel (%p215) target = $region16
        $region15: #{tpu_custom_call.1} parent=11 // pred_region
          _
        $region16: #{tpu_custom_call.1} parent=11 // pred_fallthru
          _
        // Predicated region
        $region17: #{tpu_custom_call.1} parent=11 // pred_check
          %p218 = pneg %p172
        $region18: #{tpu_custom_call.1} parent=11 // pred_check_branch
          %220 = sbr.rel (%p218) target = $region20
        $region19: #{tpu_custom_call.1} parent=11 // pred_region
          _
        $region20: #{tpu_custom_call.1} parent=11 // pred_fallthru
          _
      $region12: #{tpu_custom_call.1} parent=5 // pred_fallthru
        _
      %p221 = scmp.lt.s32.totalorder %s14, 16
      // Predicated region
      $region21: #{tpu_custom_call.1} parent=5 // pred_check
        %p222 = pneg %p221
      $region22: #{tpu_custom_call.1} parent=5 // pred_check_branch
        %224 = sbr.rel (%p222) target = $region24
      $region23: #{tpu_custom_call.1} parent=5 // pred_region
        // Predicated region
        $region25: #{tpu_custom_call.1} parent=23 // pred_check
          %p225 = pneg %p64
        $region26: #{tpu_custom_call.1} parent=23 // pred_check_branch
          %227 = sbr.rel (%p225) target = $region28
        $region27: #{tpu_custom_call.1} parent=23 // pred_region
          %s228 = smul.u32 16, %s22
          %p229 = scmp.lt.s32.totalorder %s21, 1
          %s230 = scalar_select %p229, %s21, 1
          %p231 = scmp.lt.s32.totalorder %s23, 1
          %s232 = scalar_select %p231, %s23, 1
          %p233 = scmp.lt.s32.totalorder %s228, 31
          %s234 = scalar_select %p233, %s228, 31
          %s235 = smul.addr %s232, 32
          %s236 = sadd.s32 %s234, %s235
          %s237 = smul.addr %s230, 64
          %s238 = sadd.s32 %s236, %s237
          %s239 = smul.addr %s238, 4
          %s240 = scalar_lea.vmem %s0, %s239
          %s241 = smul.u32 16, %s22
        $region28: #{tpu_custom_call.1} parent=23 // pred_fallthru
          _
        // Predicated region
        $region29: #{tpu_custom_call.1} parent=23 // pred_check
          %p242 = pneg %p94
        $region30: #{tpu_custom_call.1} parent=23 // pred_check_branch
          %244 = sbr.rel (%p242) target = $region32
        $region31: #{tpu_custom_call.1} parent=23 // pred_region
          %s245 = sand.u32 %s84, 1
          %s246 = sand.u32 %s84, 1
          %s247 = smul.addr %s246, 8
          %s248 = scalar_lea.vmem [#allocation6], %s247
          %s249 = smul.addr %s23, 4
          %s250 = sadd.s32 %s24, %s249
          %s251 = smul.addr %s21, 8
          %s252 = sadd.s32 %s250, %s251
          %s253 = smul.addr %s252, 4
          %s254 = scalar_lea.vmem %s1, %s253
          // Predicated region
          $region33: #{tpu_custom_call.1} parent=31 // pred_check
            _
          $region34: #{tpu_custom_call.1} parent=31 // pred_check_branch
            %256 = sbr.rel (0) target = $region36
          $region35: #{tpu_custom_call.1} parent=31 // pred_region
            // Predicated region
            $region37: #{tpu_custom_call.1} parent=35 // pred_check
              _
            $region38: #{tpu_custom_call.1} parent=35 // pred_check_branch
              %258 = sbr.rel target = $region40
            $region39: #{tpu_custom_call.1} parent=35 // pred_region
              // Predicated region
              $region52: #{tpu_custom_call.1} parent=39 // pred_check
                _
              $region53: #{tpu_custom_call.1} parent=39 // pred_check_branch
                %275 = sbr.rel (0) target = $region55
              $region54: #{tpu_custom_call.1} parent=39 // pred_region
                loop: start=0, step=1, limit=1
                $region56: #{tpu_custom_call.1} parent=54 // loop_pre_header
                  _
                $region57: #{tpu_custom_call.1} parent=54 // loop_header
                  %s277 = sphi 0, %s281
                  %p278 = scmp.ge.s32.totalorder %s277, 1
                  %s282 = sphi %s254, %s254
                  %s283 = sphi %s248, %s248
                $region58: #{tpu_custom_call.1} parent=54 // loop_header_branch
                  %280 = sbr.rel (%p278) target = $region62
                $region59: #{tpu_custom_call.1} parent=54 // loop_body
                  _
                $region60: #{tpu_custom_call.1} parent=54 // loop_footer
                  %s281 = sadd.s32 1, %s277
                $region61: #{tpu_custom_call.1} parent=54 // loop_footer_branch
                  %276 = sbr.rel target = $region57
                $region62: #{tpu_custom_call.1} parent=54 // loop_exit
                  _
                loop: start=0, step=1, limit=1
                $region63: #{tpu_custom_call.1} parent=54 // loop_pre_header
                  _
                $region64: #{tpu_custom_call.1} parent=54 // loop_header
                  %s286 = sphi 0, %s290
                  %p287 = scmp.ge.s32.totalorder %s286, 1
                  %s291 = sphi %s254, %s254
                  %s292 = sphi %s248, %s248
                $region65: #{tpu_custom_call.1} parent=54 // loop_header_branch
                  %289 = sbr.rel (%p287) target = $region69
                $region66: #{tpu_custom_call.1} parent=54 // loop_body
                  %v293 = vld [vmem:[%s291] sm:$0xf]
                  %294 = vst [vmem:[%s292] sm:$0xf] %v293
                  %v295 = vld [vmem:[%s291 + $0x8] sm:$0xf]
                  %296 = vst [vmem:[%s292 + $0x4] sm:$0xf] %v295
                $region67: #{tpu_custom_call.1} parent=54 // loop_footer
                  %s290 = sadd.s32 1, %s286
                $region68: #{tpu_custom_call.1} parent=54 // loop_footer_branch
                  %285 = sbr.rel target = $region64
                $region69: #{tpu_custom_call.1} parent=54 // loop_exit
                  _
              $region55: #{tpu_custom_call.1} parent=39 // pred_fallthru
                _
            $region40: #{tpu_custom_call.1} parent=35 // pred_fallthru
              _
            // Predicated region
            $region41: #{tpu_custom_call.1} parent=35 // pred_check
              _
            $region42: #{tpu_custom_call.1} parent=35 // pred_check_branch
              %260 = sbr.rel (0) target = $region44
            $region43: #{tpu_custom_call.1} parent=35 // pred_region
              loop: start=0, step=1, limit=1
              $region45: #{tpu_custom_call.1} parent=43 // loop_pre_header
                _
              $region46: #{tpu_custom_call.1} parent=43 // loop_header
                %s263 = sphi 0, %s267
                %p264 = scmp.ge.s32.totalorder %s263, 1
                %s268 = sphi %s254, %s254
                %s269 = sphi %s248, %s248
              $region47: #{tpu_custom_call.1} parent=43 // loop_header_branch
                %266 = sbr.rel (%p264) target = $region51
              $region48: #{tpu_custom_call.1} parent=43 // loop_body
                %v270 = vld [vmem:[%s268] sm:$0xf]
                %271 = vst [vmem:[%s269] sm:$0xf] %v270
                %v272 = vld [vmem:[%s268 + $0x8] sm:$0xf]
                %273 = vst [vmem:[%s269 + $0x4] sm:$0xf] %v272
              $region49: #{tpu_custom_call.1} parent=43 // loop_footer
                %s267 = sadd.s32 1, %s263
              $region50: #{tpu_custom_call.1} parent=43 // loop_footer_branch
                %262 = sbr.rel target = $region46
              $region51: #{tpu_custom_call.1} parent=43 // loop_exit
                _
            $region44: #{tpu_custom_call.1} parent=35 // pred_fallthru
              _
          $region36: #{tpu_custom_call.1} parent=31 // pred_fallthru
            _
          %297 = vnop
        $region32: #{tpu_custom_call.1} parent=23 // pred_fallthru
          _
        // Predicated region
        $region70: #{tpu_custom_call.1} parent=23 // pred_check
          %p298 = pneg %p124
        $region71: #{tpu_custom_call.1} parent=23 // pred_check_branch
          %300 = sbr.rel (%p298) target = $region73
        $region72: #{tpu_custom_call.1} parent=23 // pred_region
          %s301 = smul.u32 16, %s24
          %p302 = scmp.lt.s32.totalorder %s21, 1
          %s303 = scalar_select %p302, %s21, 1
          %p304 = scmp.lt.s32.totalorder %s23, 1
          %s305 = scalar_select %p304, %s23, 1
          %p306 = scmp.lt.s32.totalorder %s301, 31
          %s307 = scalar_select %p306, %s301, 31
          %s308 = smul.addr %s305, 32
          %s309 = sadd.s32 %s307, %s308
          %s310 = smul.addr %s303, 64
          %s311 = sadd.s32 %s309, %s310
          %s312 = smul.addr %s311, 4
          %s313 = scalar_lea.vmem %s2, %s312
          %s314 = smul.u32 16, %s24
        $region73: #{tpu_custom_call.1} parent=23 // pred_fallthru
          _
      $region24: #{tpu_custom_call.1} parent=5 // pred_fallthru
        _
      %p315 = scmp.le.s32.totalorder 1, %s14
      %p316 = scmp.lt.s32.totalorder %s14, 17
      %p317 = pnand %p315, %p316
      %p318 = pneg %p317
      // Predicated region
      $region74: #{tpu_custom_call.1} parent=5 // pred_check
        _
      $region75: #{tpu_custom_call.1} parent=5 // pred_check_branch
        %320 = sbr.rel (%p317) target = $region77
      $region76: #{tpu_custom_call.1} parent=5 // pred_region
        %s321 = ssub.s32 %s14, 1
        %s322 = sand.u32 %s87, 1
        %s323 = sand.u32 %s87, 1
        %s324 = smul.addr %s323, 8
        %s325 = scalar_lea.vmem [#allocation6], %s324
        // Predicated region
        $region78: #{tpu_custom_call.1} parent=76 // pred_check
          %p326 = pneg %p100
        $region79: #{tpu_custom_call.1} parent=76 // pred_check_branch
          %328 = sbr.rel (%p326) target = $region81
        $region80: #{tpu_custom_call.1} parent=76 // pred_region
          _
        $region81: #{tpu_custom_call.1} parent=76 // pred_fallthru
          _
        %s329 = smul.u32 16, %s26
        %p330 = scmp.lt.s32.totalorder %s25, 1
        %s331 = scalar_select %p330, %s25, 1
        %p332 = scmp.lt.s32.totalorder %s27, 1
        %s333 = scalar_select %p332, %s27, 1
        %p334 = scmp.lt.s32.totalorder %s329, 31
        %s335 = scalar_select %p334, %s329, 31
        %s336 = smul.addr %s333, 32
        %s337 = sadd.s32 %s335, %s336
        %s338 = smul.addr %s331, 64
        %s339 = sadd.s32 %s337, %s338
        %s340 = smul.addr %s339, 4
        %s341 = scalar_lea.vmem %s0, %s340
        %p342 = pneg %p70
        %p343 = pneg %p67
        %s344 = sand.u32 %s87, 1
        %s345 = sand.u32 %s87, 1
        %s346 = smul.addr %s345, 8
        %s347 = scalar_lea.vmem [#allocation6], %s346
        %p348 = pneg %p100
        %p349 = pneg %p97
        %s350 = smul.u32 16, %s28
        %p351 = scmp.lt.s32.totalorder %s25, 1
        %s352 = scalar_select %p351, %s25, 1
        %p353 = scmp.lt.s32.totalorder %s27, 1
        %s354 = scalar_select %p353, %s27, 1
        %p355 = scmp.lt.s32.totalorder %s350, 31
        %s356 = scalar_select %p355, %s350, 31
        %s357 = smul.addr %s354, 32
        %s358 = sadd.s32 %s356, %s357
        %s359 = smul.addr %s352, 64
        %s360 = sadd.s32 %s358, %s359
        %s361 = smul.addr %s360, 4
        %s362 = scalar_lea.vmem %s2, %s361
        %p363 = pneg %p130
        %p364 = pneg %p127
        %p365 = pneg %p151
        %p366 = pneg %p148
        %p367 = pneg %p172
        %p368 = pneg %p169
        %p369 = pneg %p200
        %p370 = pneg %p197
        %s371 = sand.u32 %s187, 1
        %s372 = scalar_lea.sflag [#allocation8], %s371
        %s373 = sand.u32 %s187, 1
        %s374 = smul.addr %s373, 128
        %s375 = scalar_lea.vmem [#allocation7], %s374
        %s376 = smul.u32 16, %s26
        %p377 = scmp.lt.s32.totalorder %s25, 1
        %s378 = scalar_select %p377, %s25, 1
        %p379 = scmp.lt.s32.totalorder %s27, 1
        %s380 = scalar_select %p379, %s27, 1
        %p381 = scmp.lt.s32.totalorder %s376, 31
        %s382 = scalar_select %p381, %s376, 31
        %s383 = smul.addr %s380, 32
        %s384 = sadd.s32 %s382, %s383
        %s385 = smul.addr %s378, 64
        %s386 = sadd.s32 %s384, %s385
        %s387 = smul.addr %s386, 4
        %s388 = scalar_lea.vmem %s0, %s387
        %s389 = smul.u32 16, %s26
        %s390 = smul.u32 16, %s28
        %p391 = scmp.lt.s32.totalorder %s25, 1
        %s392 = scalar_select %p391, %s25, 1
        %p393 = scmp.lt.s32.totalorder %s27, 1
        %s394 = scalar_select %p393, %s27, 1
        %p395 = scmp.lt.s32.totalorder %s390, 31
        %s396 = scalar_select %p395, %s390, 31
        %s397 = smul.addr %s394, 32
        %s398 = sadd.s32 %s396, %s397
        %s399 = smul.addr %s392, 64
        %s400 = sadd.s32 %s398, %s399
        %s401 = smul.addr %s400, 4
        %s402 = scalar_lea.vmem %s2, %s401
        %s403 = smul.u32 16, %s28
        %s404 = smul.u32 16, %s26
        %p406 = scmp.eq.s32.totalorder %s28, 0
        // Predicated region
        $region82: #{tpu_custom_call.1} parent=76 // pred_check
          %p407 = pneg %p406
        $region83: #{tpu_custom_call.1} parent=76 // pred_check_branch
          %409 = sbr.rel (%p407) target = $region85
        $region84: #{tpu_custom_call.1} parent=76 // pred_region
          %vm410 = vcmask 7168
          %411 = vst.msk [vmem:[#allocation2] sm:$0xff] %vm410, -inf
          %412 = vst.msk [vmem:[#allocation2 + $0x8] sm:$0xff] %vm410, -inf
          %413 = vst.msk [vmem:[#allocation2 + $0x10] sm:$0xff] %vm410, -inf
          %414 = vst.msk [vmem:[#allocation2 + $0x18] sm:$0xff] %vm410, -inf
          %415 = vst.msk [vmem:[#allocation2 + $0x20] sm:$0xff] %vm410, -inf
          %416 = vst.msk [vmem:[#allocation2 + $0x28] sm:$0xff] %vm410, -inf
          %417 = vst.msk [vmem:[#allocation2 + $0x30] sm:$0xff] %vm410, -inf
          %418 = vst.msk [vmem:[#allocation2 + $0x38] sm:$0xff] %vm410, -inf
          %419 = vst.msk [vmem:[#allocation2 + $0x40] sm:$0xff] %vm410, -inf
          %420 = vst.msk [vmem:[#allocation2 + $0x48] sm:$0xff] %vm410, -inf
          %421 = vst.msk [vmem:[#allocation2 + $0x50] sm:$0xff] %vm410, -inf
          %422 = vst.msk [vmem:[#allocation2 + $0x58] sm:$0xff] %vm410, -inf
          %423 = vst.msk [vmem:[#allocation2 + $0x60] sm:$0xff] %vm410, -inf
          %424 = vst.msk [vmem:[#allocation2 + $0x68] sm:$0xff] %vm410, -inf
          %425 = vst.msk [vmem:[#allocation2 + $0x70] sm:$0xff] %vm410, -inf
          %426 = vst.msk [vmem:[#allocation2 + $0x78] sm:$0xff] %vm410, -inf
          %427 = vst.msk [vmem:[#allocation3] sm:$0xff] %vm410, 0.0
          %428 = vst.msk [vmem:[#allocation3 + $0x8] sm:$0xff] %vm410, 0.0
          %429 = vst.msk [vmem:[#allocation3 + $0x10] sm:$0xff] %vm410, 0.0
          %430 = vst.msk [vmem:[#allocation3 + $0x18] sm:$0xff] %vm410, 0.0
          %431 = vst.msk [vmem:[#allocation3 + $0x20] sm:$0xff] %vm410, 0.0
          %432 = vst.msk [vmem:[#allocation3 + $0x28] sm:$0xff] %vm410, 0.0
          %433 = vst.msk [vmem:[#allocation3 + $0x30] sm:$0xff] %vm410, 0.0
          %434 = vst.msk [vmem:[#allocation3 + $0x38] sm:$0xff] %vm410, 0.0
          %435 = vst.msk [vmem:[#allocation3 + $0x40] sm:$0xff] %vm410, 0.0
          %436 = vst.msk [vmem:[#allocation3 + $0x48] sm:$0xff] %vm410, 0.0
          %437 = vst.msk [vmem:[#allocation3 + $0x50] sm:$0xff] %vm410, 0.0
          %438 = vst.msk [vmem:[#allocation3 + $0x58] sm:$0xff] %vm410, 0.0
          %439 = vst.msk [vmem:[#allocation3 + $0x60] sm:$0xff] %vm410, 0.0
          %440 = vst.msk [vmem:[#allocation3 + $0x68] sm:$0xff] %vm410, 0.0
          %441 = vst.msk [vmem:[#allocation3 + $0x70] sm:$0xff] %vm410, 0.0
          %442 = vst.msk [vmem:[#allocation3 + $0x78] sm:$0xff] %vm410, 0.0
          %vm443 = vcmask 130048
          %444 = vst.msk [vmem:[#allocation4] sm:$0xff] %vm443, 0.0
          %445 = vst.msk [vmem:[#allocation4 + $0x8] sm:$0xff] %vm443, 0.0
          %446 = vst.msk [vmem:[#allocation4 + $0x10] sm:$0xff] %vm443, 0.0
          %447 = vst.msk [vmem:[#allocation4 + $0x18] sm:$0xff] %vm443, 0.0
          %448 = vst.msk [vmem:[#allocation4 + $0x20] sm:$0xff] %vm443, 0.0
          %449 = vst.msk [vmem:[#allocation4 + $0x28] sm:$0xff] %vm443, 0.0
          %450 = vst.msk [vmem:[#allocation4 + $0x30] sm:$0xff] %vm443, 0.0
          %451 = vst.msk [vmem:[#allocation4 + $0x38] sm:$0xff] %vm443, 0.0
          %452 = vst.msk [vmem:[#allocation4 + $0x40] sm:$0xff] %vm443, 0.0
          %453 = vst.msk [vmem:[#allocation4 + $0x48] sm:$0xff] %vm443, 0.0
          %454 = vst.msk [vmem:[#allocation4 + $0x50] sm:$0xff] %vm443, 0.0
          %455 = vst.msk [vmem:[#allocation4 + $0x58] sm:$0xff] %vm443, 0.0
          %456 = vst.msk [vmem:[#allocation4 + $0x60] sm:$0xff] %vm443, 0.0
          %457 = vst.msk [vmem:[#allocation4 + $0x68] sm:$0xff] %vm443, 0.0
          %458 = vst.msk [vmem:[#allocation4 + $0x70] sm:$0xff] %vm443, 0.0
          %459 = vst.msk [vmem:[#allocation4 + $0x78] sm:$0xff] %vm443, 0.0
        $region85: #{tpu_custom_call.1} parent=76 // pred_fallthru
          _
        %p460 = scmp.eq.s32.totalorder %s27, 0
        %p461 = pnand %p406, %p460
        %p462 = pneg %p461
        // Predicated region
        $region86: #{tpu_custom_call.1} parent=76 // pred_check
          _
        $region87: #{tpu_custom_call.1} parent=76 // pred_check_branch
          %464 = sbr.rel (%p461) target = $region89
        $region88: #{tpu_custom_call.1} parent=76 // pred_region
          %465 = vst [vmem:[#allocation5] sm:$0xff] 0.0
          %466 = vst [vmem:[#allocation5 + $0x8] sm:$0xff] 0.0
          %467 = vst [vmem:[#allocation5 + $0x10] sm:$0xff] 0.0
          %468 = vst [vmem:[#allocation5 + $0x18] sm:$0xff] 0.0
          %469 = vst [vmem:[#allocation5 + $0x20] sm:$0xff] 0.0
          %470 = vst [vmem:[#allocation5 + $0x28] sm:$0xff] 0.0
          %471 = vst [vmem:[#allocation5 + $0x30] sm:$0xff] 0.0
          %472 = vst [vmem:[#allocation5 + $0x38] sm:$0xff] 0.0
          %473 = vst [vmem:[#allocation5 + $0x40] sm:$0xff] 0.0
          %474 = vst [vmem:[#allocation5 + $0x48] sm:$0xff] 0.0
          %475 = vst [vmem:[#allocation5 + $0x50] sm:$0xff] 0.0
          %476 = vst [vmem:[#allocation5 + $0x58] sm:$0xff] 0.0
          %477 = vst [vmem:[#allocation5 + $0x60] sm:$0xff] 0.0
          %478 = vst [vmem:[#allocation5 + $0x68] sm:$0xff] 0.0
          %479 = vst [vmem:[#allocation5 + $0x70] sm:$0xff] 0.0
          %480 = vst [vmem:[#allocation5 + $0x78] sm:$0xff] 0.0
        $region89: #{tpu_custom_call.1} parent=76 // pred_fallthru
          _
        %v481 = vld [vmem:[%s388] sm:$0xf]
        %v482 = vld [vmem:[%s388 + $0x4] sm:$0xf]
        %v483 = vld [vmem:[%s388 + $0x8] sm:$0xf]
        %v484 = vld [vmem:[%s388 + $0xc] sm:$0xf]
        %v485 = vld [vmem:[%s388 + $0x10] sm:$0xf]
        %v486 = vld [vmem:[%s388 + $0x14] sm:$0xf]
        %v487 = vld [vmem:[%s388 + $0x18] sm:$0xf]
        %v488 = vld [vmem:[%s388 + $0x1c] sm:$0xf]
        %v489 = vld [vmem:[%s388 + $0x20] sm:$0xf]
        %v490 = vld [vmem:[%s388 + $0x24] sm:$0xf]
        %v491 = vld [vmem:[%s388 + $0x28] sm:$0xf]
        %v492 = vld [vmem:[%s388 + $0x2c] sm:$0xf]
        %v493 = vld [vmem:[%s388 + $0x30] sm:$0xf]
        %v494 = vld [vmem:[%s388 + $0x34] sm:$0xf]
        %v495 = vld [vmem:[%s388 + $0x38] sm:$0xf]
        %v496 = vld [vmem:[%s388 + $0x3c] sm:$0xf]
        %v497 = vld [vmem:[%s325] sm:$0xf]
        %v498 = vld [vmem:[%s325 + $0x4] sm:$0xf]
        %v499 = vld [vmem:[%s402] sm:$0xf]
        %v500 = vld [vmem:[%s402 + $0x4] sm:$0xf]
        %v501 = vld [vmem:[%s402 + $0x8] sm:$0xf]
        %v502 = vld [vmem:[%s402 + $0xc] sm:$0xf]
        %v503 = vld [vmem:[%s402 + $0x10] sm:$0xf]
        %v504 = vld [vmem:[%s402 + $0x14] sm:$0xf]
        %v505 = vld [vmem:[%s402 + $0x18] sm:$0xf]
        %v506 = vld [vmem:[%s402 + $0x1c] sm:$0xf]
        %v507 = vld [vmem:[%s402 + $0x20] sm:$0xf]
        %v508 = vld [vmem:[%s402 + $0x24] sm:$0xf]
        %v509 = vld [vmem:[%s402 + $0x28] sm:$0xf]
        %v510 = vld [vmem:[%s402 + $0x2c] sm:$0xf]
        %v511 = vld [vmem:[%s402 + $0x30] sm:$0xf]
        %v512 = vld [vmem:[%s402 + $0x34] sm:$0xf]
        %v513 = vld [vmem:[%s402 + $0x38] sm:$0xf]
        %v514 = vld [vmem:[%s402 + $0x3c] sm:$0xf]
        %v531 = vunpack.c.l.b16 %v481
        %v532 = vunpack.c.l.b16 %v482
        %v533 = vunpack.c.l.b16 %v483
        %v534 = vunpack.c.l.b16 %v484
        %v535 = vunpack.c.l.b16 %v485
        %v536 = vunpack.c.l.b16 %v486
        %v537 = vunpack.c.l.b16 %v487
        %v538 = vunpack.c.l.b16 %v488
        %v539 = vunpack.c.l.b16 %v489
        %v540 = vunpack.c.l.b16 %v490
        %v541 = vunpack.c.l.b16 %v491
        %v542 = vunpack.c.l.b16 %v492
        %v543 = vunpack.c.l.b16 %v493
        %v544 = vunpack.c.l.b16 %v494
        %v545 = vunpack.c.l.b16 %v495
        %v546 = vunpack.c.l.b16 %v496
        %v547 = vpack.c.b16 %v532, %v531
        %v548 = vpack.c.b16 %v534, %v533
        %v549 = vpack.c.b16 %v536, %v535
        %v550 = vpack.c.b16 %v538, %v537
        %v551 = vpack.c.b16 %v540, %v539
        %v552 = vpack.c.b16 %v542, %v541
        %v553 = vpack.c.b16 %v544, %v543
        %v554 = vpack.c.b16 %v546, %v545
        %v557 = vunpack.c.l.b16 %v497
        %v558 = vunpack.c.l.b16 %v498
        %v559 = vpack.c.b16 %v558, %v557
        %vm561 = vcmask 130048
        %v563 = vsel %vm561, %v547, 0
        %v566 = vsel %vm561, %v548, 0
        %v569 = vsel %vm561, %v549, 0
        %v572 = vsel %vm561, %v550, 0
        %v575 = vsel %vm561, %v551, 0
        %v578 = vsel %vm561, %v552, 0
        %v581 = vsel %vm561, %v553, 0
        %v584 = vsel %vm561, %v554, 0
        %586 = vmatprep.subr.bf16.mxu0 0
        %587 = vmatpush1.bf16.msra.mxu0 %v559
        %588 = vmatprep.subr.bf16.mxu0 0
        %589 = vmatpush1.bf16.msra.mxu0 0
        %590 = vmatprep.subr.bf16.mxu0 0
        %591 = vmatpush1.bf16.msra.mxu0 0
        %592 = vmatprep.subr.bf16.mxu0 0
        %593 = vmatpush1.bf16.msra.mxu0 0
        %594 = vmatprep.subr.bf16.mxu0 0
        %595 = vmatpush1.bf16.msra.mxu0 0
        %596 = vmatprep.subr.bf16.mxu0 0
        %597 = vmatpush1.bf16.msra.mxu0 0
        %598 = vmatprep.subr.bf16.mxu0 0
        %599 = vmatpush1.bf16.msra.mxu0 0
        %600 = vmatprep.subr.bf16.mxu0 0
        %601 = vmatpush1.bf16.msra.mxu0 0
        %602 = vmatprep.subr.bf16.mxu0 0
        %603 = vmatpush1.bf16.msra.mxu0 0
        %604 = vmatprep.subr.bf16.mxu0 0
        %605 = vmatpush1.bf16.msra.mxu0 0
        %606 = vmatprep.subr.bf16.mxu0 0
        %607 = vmatpush1.bf16.msra.mxu0 0
        %608 = vmatprep.subr.bf16.mxu0 0
        %609 = vmatpush1.bf16.msra.mxu0 0
        %610 = vmatprep.subr.bf16.mxu0 0
        %611 = vmatpush1.bf16.msra.mxu0 0
        %612 = vmatprep.subr.bf16.mxu0 0
        %613 = vmatpush1.bf16.msra.mxu0 0
        %614 = vmatprep.subr.bf16.mxu0 0
        %615 = vmatpush1.bf16.msra.mxu0 0
        %616 = vmatprep.subr.bf16.mxu0 0
        %617 = vmatpush1.bf16.msra.mxu0 0
        %618 = vmatprep.mubr.bf16.mxu0 0
        %619 = vmatmul.mubr.bf16.gmra.mrb[0].mxu0 %v563
        %v620 = vpop.f32.mrb[0].mxu0
        %v621 = vadd.f32 0.0, %v620
        %v622 = vpop.f32.mrb[0].mxu0
        %v623 = vpop.f32.mrb[0].mxu0
        %v624 = vadd.f32 0.0, %v623
        %v625 = vpop.f32.mrb[0].mxu0
        %626 = vmatprep.mubr.bf16.mxu0 0
        %627 = vmatmul.mubr.bf16.gmra.mrb[0].mxu0 %v566
        %v628 = vpop.f32.mrb[0].mxu0
        %v629 = vadd.f32 0.0, %v628
        %v630 = vpop.f32.mrb[0].mxu0
        %v631 = vpop.f32.mrb[0].mxu0
        %v632 = vadd.f32 0.0, %v631
        %v633 = vpop.f32.mrb[0].mxu0
        %634 = vmatprep.mubr.bf16.mxu0 0
        %635 = vmatmul.mubr.bf16.gmra.mrb[0].mxu0 %v569
        %v636 = vpop.f32.mrb[0].mxu0
        %v637 = vadd.f32 0.0, %v636
        %v638 = vpop.f32.mrb[0].mxu0
        %v639 = vpop.f32.mrb[0].mxu0
        %v640 = vadd.f32 0.0, %v639
        %v641 = vpop.f32.mrb[0].mxu0
        %642 = vmatprep.mubr.bf16.mxu0 0
        %643 = vmatmul.mubr.bf16.gmra.mrb[0].mxu0 %v572
        %v644 = vpop.f32.mrb[0].mxu0
        %v645 = vadd.f32 0.0, %v644
        %v646 = vpop.f32.mrb[0].mxu0
        %v647 = vpop.f32.mrb[0].mxu0
        %v648 = vadd.f32 0.0, %v647
        %v649 = vpop.f32.mrb[0].mxu0
        %650 = vmatprep.mubr.bf16.mxu0 0
        %651 = vmatmul.mubr.bf16.gmra.mrb[0].mxu0 %v575
        %v652 = vpop.f32.mrb[0].mxu0
        %v653 = vadd.f32 0.0, %v652
        %v654 = vpop.f32.mrb[0].mxu0
        %v655 = vpop.f32.mrb[0].mxu0
        %v656 = vadd.f32 0.0, %v655
        %v657 = vpop.f32.mrb[0].mxu0
        %658 = vmatprep.mubr.bf16.mxu0 0
        %659 = vmatmul.mubr.bf16.gmra.mrb[0].mxu0 %v578
        %v660 = vpop.f32.mrb[0].mxu0
        %v661 = vadd.f32 0.0, %v660
        %v662 = vpop.f32.mrb[0].mxu0
        %v663 = vpop.f32.mrb[0].mxu0
        %v664 = vadd.f32 0.0, %v663
        %v665 = vpop.f32.mrb[0].mxu0
        %666 = vmatprep.mubr.bf16.mxu0 0
        %667 = vmatmul.mubr.bf16.gmra.mrb[0].mxu0 %v581
        %v668 = vpop.f32.mrb[0].mxu0
        %v669 = vadd.f32 0.0, %v668
        %v670 = vpop.f32.mrb[0].mxu0
        %v671 = vpop.f32.mrb[0].mxu0
        %v672 = vadd.f32 0.0, %v671
        %v673 = vpop.f32.mrb[0].mxu0
        %674 = vmatprep.mubr.bf16.mxu0 0
        %675 = vmatmul.mubr.bf16.gmra.mrb[0].mxu0 %v584
        %v676 = vpop.f32.mrb[0].mxu0
        %v677 = vadd.f32 0.0, %v676
        %v678 = vpop.f32.mrb[0].mxu0
        %v679 = vpop.f32.mrb[0].mxu0
        %v680 = vadd.f32 0.0, %v679
        %v681 = vpop.f32.mrb[0].mxu0
        %682 = vdwg.mxu0
        %v683 = vld [vmem:[#allocation2] sm:$0xff]
        %v684 = vld [vmem:[#allocation2 + $0x8] sm:$0xff]
        %v685 = vld [vmem:[#allocation2 + $0x10] sm:$0xff]
        %v686 = vld [vmem:[#allocation2 + $0x18] sm:$0xff]
        %v687 = vld [vmem:[#allocation2 + $0x20] sm:$0xff]
        %v688 = vld [vmem:[#allocation2 + $0x28] sm:$0xff]
        %v689 = vld [vmem:[#allocation2 + $0x30] sm:$0xff]
        %v690 = vld [vmem:[#allocation2 + $0x38] sm:$0xff]
        %v691 = vld [vmem:[#allocation2 + $0x40] sm:$0xff]
        %v692 = vld [vmem:[#allocation2 + $0x48] sm:$0xff]
        %v693 = vld [vmem:[#allocation2 + $0x50] sm:$0xff]
        %v694 = vld [vmem:[#allocation2 + $0x58] sm:$0xff]
        %v695 = vld [vmem:[#allocation2 + $0x60] sm:$0xff]
        %v696 = vld [vmem:[#allocation2 + $0x68] sm:$0xff]
        %v697 = vld [vmem:[#allocation2 + $0x70] sm:$0xff]
        %v698 = vld [vmem:[#allocation2 + $0x78] sm:$0xff]
        %699 = vmax.xlane.f32.xlu0 %v621
        %v700 = vpop.xlane.xlu0 %699
        %701 = vmax.xlane.f32.xlu0 %v624
        %v702 = vpop.xlane.xlu0 %701
        %703 = vmax.xlane.f32.xlu0 %v629
        %v704 = vpop.xlane.xlu0 %703
        %705 = vmax.xlane.f32.xlu0 %v632
        %v706 = vpop.xlane.xlu0 %705
        %707 = vmax.xlane.f32.xlu0 %v637
        %v708 = vpop.xlane.xlu0 %707
        %709 = vmax.xlane.f32.xlu0 %v640
        %v710 = vpop.xlane.xlu0 %709
        %711 = vmax.xlane.f32.xlu0 %v645
        %v712 = vpop.xlane.xlu0 %711
        %713 = vmax.xlane.f32.xlu0 %v648
        %v714 = vpop.xlane.xlu0 %713
        %715 = vmax.xlane.f32.xlu0 %v653
        %v716 = vpop.xlane.xlu0 %715
        %717 = vmax.xlane.f32.xlu0 %v656
        %v718 = vpop.xlane.xlu0 %717
        %719 = vmax.xlane.f32.xlu0 %v661
        %v720 = vpop.xlane.xlu0 %719
        %721 = vmax.xlane.f32.xlu0 %v664
        %v722 = vpop.xlane.xlu0 %721
        %723 = vmax.xlane.f32.xlu0 %v669
        %v724 = vpop.xlane.xlu0 %723
        %725 = vmax.xlane.f32.xlu0 %v672
        %v726 = vpop.xlane.xlu0 %725
        %727 = vmax.xlane.f32.xlu0 %v677
        %v728 = vpop.xlane.xlu0 %727
        %729 = vmax.xlane.f32.xlu0 %v680
        %v730 = vpop.xlane.xlu0 %729
        %v731 = vmax.f32 %v683, %v700
        %v732 = vmax.f32 %v684, %v702
        %v733 = vmax.f32 %v685, %v704
        %v734 = vmax.f32 %v686, %v706
        %v735 = vmax.f32 %v687, %v708
        %v736 = vmax.f32 %v688, %v710
        %v737 = vmax.f32 %v689, %v712
        %v738 = vmax.f32 %v690, %v714
        %v739 = vmax.f32 %v691, %v716
        %v740 = vmax.f32 %v692, %v718
        %v741 = vmax.f32 %v693, %v720
        %v742 = vmax.f32 %v694, %v722
        %v743 = vmax.f32 %v695, %v724
        %v744 = vmax.f32 %v696, %v726
        %v745 = vmax.f32 %v697, %v728
        %v746 = vmax.f32 %v698, %v730
        %748 = vset.pattern.permute.xlu0 0
        %749 = vperm.xlu0 %748, %v731
        %v750 = vpop.permute.xlu0 %749
        %753 = vset.pattern.permute.xlu0 0
        %754 = vperm.xlu0 %753, %v732
        %v755 = vpop.permute.xlu0 %754
        %758 = vset.pattern.permute.xlu0 0
        %759 = vperm.xlu0 %758, %v733
        %v760 = vpop.permute.xlu0 %759
        %763 = vset.pattern.permute.xlu0 0
        %764 = vperm.xlu0 %763, %v734
        %v765 = vpop.permute.xlu0 %764
        %768 = vset.pattern.permute.xlu0 0
        %769 = vperm.xlu0 %768, %v735
        %v770 = vpop.permute.xlu0 %769
        %773 = vset.pattern.permute.xlu0 0
        %774 = vperm.xlu0 %773, %v736
        %v775 = vpop.permute.xlu0 %774
        %778 = vset.pattern.permute.xlu0 0
        %779 = vperm.xlu0 %778, %v737
        %v780 = vpop.permute.xlu0 %779
        %783 = vset.pattern.permute.xlu0 0
        %784 = vperm.xlu0 %783, %v738
        %v785 = vpop.permute.xlu0 %784
        %788 = vset.pattern.permute.xlu0 0
        %789 = vperm.xlu0 %788, %v739
        %v790 = vpop.permute.xlu0 %789
        %793 = vset.pattern.permute.xlu0 0
        %794 = vperm.xlu0 %793, %v740
        %v795 = vpop.permute.xlu0 %794
        %798 = vset.pattern.permute.xlu0 0
        %799 = vperm.xlu0 %798, %v741
        %v800 = vpop.permute.xlu0 %799
        %803 = vset.pattern.permute.xlu0 0
        %804 = vperm.xlu0 %803, %v742
        %v805 = vpop.permute.xlu0 %804
        %808 = vset.pattern.permute.xlu0 0
        %809 = vperm.xlu0 %808, %v743
        %v810 = vpop.permute.xlu0 %809
        %813 = vset.pattern.permute.xlu0 0
        %814 = vperm.xlu0 %813, %v744
        %v815 = vpop.permute.xlu0 %814
        %818 = vset.pattern.permute.xlu0 0
        %819 = vperm.xlu0 %818, %v745
        %v820 = vpop.permute.xlu0 %819
        %823 = vset.pattern.permute.xlu0 0
        %824 = vperm.xlu0 %823, %v746
        %v825 = vpop.permute.xlu0 %824
        %v827 = vsub.f32 %v621, %v750
        %v828 = vsub.f32 %v624, %v755
        %v829 = vsub.f32 %v629, %v760
        %v830 = vsub.f32 %v632, %v765
        %v831 = vsub.f32 %v637, %v770
        %v832 = vsub.f32 %v640, %v775
        %v833 = vsub.f32 %v645, %v780
        %v834 = vsub.f32 %v648, %v785
        %v835 = vsub.f32 %v653, %v790
        %v836 = vsub.f32 %v656, %v795
        %v837 = vsub.f32 %v661, %v800
        %v838 = vsub.f32 %v664, %v805
        %v839 = vsub.f32 %v669, %v810
        %v840 = vsub.f32 %v672, %v815
        %v841 = vsub.f32 %v677, %v820
        %v842 = vsub.f32 %v680, %v825
        %v843 = vmul.f32 %v827, 1.442695
        %v844 = vpow.pop %v843
        %v845 = vmul.f32 %v828, 1.442695
        %v846 = vpow.pop %v845
        %v847 = vmul.f32 %v829, 1.442695
        %v848 = vpow.pop %v847
        %v849 = vmul.f32 %v830, 1.442695
        %v850 = vpow.pop %v849
        %v851 = vmul.f32 %v831, 1.442695
        %v852 = vpow.pop %v851
        %v853 = vmul.f32 %v832, 1.442695
        %v854 = vpow.pop %v853
        %v855 = vmul.f32 %v833, 1.442695
        %v856 = vpow.pop %v855
        %v857 = vmul.f32 %v834, 1.442695
        %v858 = vpow.pop %v857
        %v859 = vmul.f32 %v835, 1.442695
        %v860 = vpow.pop %v859
        %v861 = vmul.f32 %v836, 1.442695
        %v862 = vpow.pop %v861
        %v863 = vmul.f32 %v837, 1.442695
        %v864 = vpow.pop %v863
        %v865 = vmul.f32 %v838, 1.442695
        %v866 = vpow.pop %v865
        %v867 = vmul.f32 %v839, 1.442695
        %v868 = vpow.pop %v867
        %v869 = vmul.f32 %v840, 1.442695
        %v870 = vpow.pop %v869
        %v871 = vmul.f32 %v841, 1.442695
        %v872 = vpow.pop %v871
        %v873 = vmul.f32 %v842, 1.442695
        %v874 = vpow.pop %v873
        %v875 = vsub.f32 %v683, %v731
        %v876 = vsub.f32 %v684, %v732
        %v877 = vsub.f32 %v685, %v733
        %v878 = vsub.f32 %v686, %v734
        %v879 = vsub.f32 %v687, %v735
        %v880 = vsub.f32 %v688, %v736
        %v881 = vsub.f32 %v689, %v737
        %v882 = vsub.f32 %v690, %v738
        %v883 = vsub.f32 %v691, %v739
        %v884 = vsub.f32 %v692, %v740
        %v885 = vsub.f32 %v693, %v741
        %v886 = vsub.f32 %v694, %v742
        %v887 = vsub.f32 %v695, %v743
        %v888 = vsub.f32 %v696, %v744
        %v889 = vsub.f32 %v697, %v745
        %v890 = vsub.f32 %v698, %v746
        %v891 = vmul.f32 %v875, 1.442695
        %v892 = vpow.pop %v891
        %v893 = vmul.f32 %v876, 1.442695
        %v894 = vpow.pop %v893
        %v895 = vmul.f32 %v877, 1.442695
        %v896 = vpow.pop %v895
        %v897 = vmul.f32 %v878, 1.442695
        %v898 = vpow.pop %v897
        %v899 = vmul.f32 %v879, 1.442695
        %v900 = vpow.pop %v899
        %v901 = vmul.f32 %v880, 1.442695
        %v902 = vpow.pop %v901
        %v903 = vmul.f32 %v881, 1.442695
        %v904 = vpow.pop %v903
        %v905 = vmul.f32 %v882, 1.442695
        %v906 = vpow.pop %v905
        %v907 = vmul.f32 %v883, 1.442695
        %v908 = vpow.pop %v907
        %v909 = vmul.f32 %v884, 1.442695
        %v910 = vpow.pop %v909
        %v911 = vmul.f32 %v885, 1.442695
        %v912 = vpow.pop %v911
        %v913 = vmul.f32 %v886, 1.442695
        %v914 = vpow.pop %v913
        %v915 = vmul.f32 %v887, 1.442695
        %v916 = vpow.pop %v915
        %v917 = vmul.f32 %v888, 1.442695
        %v918 = vpow.pop %v917
        %v919 = vmul.f32 %v889, 1.442695
        %v920 = vpow.pop %v919
        %v921 = vmul.f32 %v890, 1.442695
        %v922 = vpow.pop %v921
        %v923 = vld [vmem:[#allocation3] sm:$0xff]
        %v924 = vld [vmem:[#allocation3 + $0x8] sm:$0xff]
        %v925 = vld [vmem:[#allocation3 + $0x10] sm:$0xff]
        %v926 = vld [vmem:[#allocation3 + $0x18] sm:$0xff]
        %v927 = vld [vmem:[#allocation3 + $0x20] sm:$0xff]
        %v928 = vld [vmem:[#allocation3 + $0x28] sm:$0xff]
        %v929 = vld [vmem:[#allocation3 + $0x30] sm:$0xff]
        %v930 = vld [vmem:[#allocation3 + $0x38] sm:$0xff]
        %v931 = vld [vmem:[#allocation3 + $0x40] sm:$0xff]
        %v932 = vld [vmem:[#allocation3 + $0x48] sm:$0xff]
        %v933 = vld [vmem:[#allocation3 + $0x50] sm:$0xff]
        %v934 = vld [vmem:[#allocation3 + $0x58] sm:$0xff]
        %v935 = vld [vmem:[#allocation3 + $0x60] sm:$0xff]
        %v936 = vld [vmem:[#allocation3 + $0x68] sm:$0xff]
        %v937 = vld [vmem:[#allocation3 + $0x70] sm:$0xff]
        %v938 = vld [vmem:[#allocation3 + $0x78] sm:$0xff]
        %v939 = vmul.f32 %v892, %v923
        %v940 = vmul.f32 %v894, %v924
        %v941 = vmul.f32 %v896, %v925
        %v942 = vmul.f32 %v898, %v926
        %v943 = vmul.f32 %v900, %v927
        %v944 = vmul.f32 %v902, %v928
        %v945 = vmul.f32 %v904, %v929
        %v946 = vmul.f32 %v906, %v930
        %v947 = vmul.f32 %v908, %v931
        %v948 = vmul.f32 %v910, %v932
        %v949 = vmul.f32 %v912, %v933
        %v950 = vmul.f32 %v914, %v934
        %v951 = vmul.f32 %v916, %v935
        %v952 = vmul.f32 %v918, %v936
        %v953 = vmul.f32 %v920, %v937
        %v954 = vmul.f32 %v922, %v938
        %955 = vadd.xlane.f32.xlu0 %v844
        %v956 = vpop.xlane.xlu0 %955
        %957 = vadd.xlane.f32.xlu0 %v846
        %v958 = vpop.xlane.xlu0 %957
        %959 = vadd.xlane.f32.xlu0 %v848
        %v960 = vpop.xlane.xlu0 %959
        %961 = vadd.xlane.f32.xlu0 %v850
        %v962 = vpop.xlane.xlu0 %961
        %963 = vadd.xlane.f32.xlu0 %v852
        %v964 = vpop.xlane.xlu0 %963
        %965 = vadd.xlane.f32.xlu0 %v854
        %v966 = vpop.xlane.xlu0 %965
        %967 = vadd.xlane.f32.xlu0 %v856
        %v968 = vpop.xlane.xlu0 %967
        %969 = vadd.xlane.f32.xlu0 %v858
        %v970 = vpop.xlane.xlu0 %969
        %971 = vadd.xlane.f32.xlu0 %v860
        %v972 = vpop.xlane.xlu0 %971
        %973 = vadd.xlane.f32.xlu0 %v862
        %v974 = vpop.xlane.xlu0 %973
        %975 = vadd.xlane.f32.xlu0 %v864
        %v976 = vpop.xlane.xlu0 %975
        %977 = vadd.xlane.f32.xlu0 %v866
        %v978 = vpop.xlane.xlu0 %977
        %979 = vadd.xlane.f32.xlu0 %v868
        %v980 = vpop.xlane.xlu0 %979
        %981 = vadd.xlane.f32.xlu0 %v870
        %v982 = vpop.xlane.xlu0 %981
        %983 = vadd.xlane.f32.xlu0 %v872
        %v984 = vpop.xlane.xlu0 %983
        %985 = vadd.xlane.f32.xlu0 %v874
        %v986 = vpop.xlane.xlu0 %985
        %v987 = vadd.f32 %v939, %v956
        %v988 = vadd.f32 %v940, %v958
        %v989 = vadd.f32 %v941, %v960
        %v990 = vadd.f32 %v942, %v962
        %v991 = vadd.f32 %v943, %v964
        %v992 = vadd.f32 %v944, %v966
        %v993 = vadd.f32 %v945, %v968
        %v994 = vadd.f32 %v946, %v970
        %v995 = vadd.f32 %v947, %v972
        %v996 = vadd.f32 %v948, %v974
        %v997 = vadd.f32 %v949, %v976
        %v998 = vadd.f32 %v950, %v978
        %v999 = vadd.f32 %v951, %v980
        %v1000 = vadd.f32 %v952, %v982
        %v1001 = vadd.f32 %v953, %v984
        %v1002 = vadd.f32 %v954, %v986
        %vm1003 = vcmask 7168
        %1004 = vst.msk [vmem:[#allocation3] sm:$0xff] %vm1003, %v987
        %1005 = vst.msk [vmem:[#allocation3 + $0x8] sm:$0xff] %vm1003, %v988
        %1006 = vst.msk [vmem:[#allocation3 + $0x10] sm:$0xff] %vm1003, %v989
        %1007 = vst.msk [vmem:[#allocation3 + $0x18] sm:$0xff] %vm1003, %v990
        %1008 = vst.msk [vmem:[#allocation3 + $0x20] sm:$0xff] %vm1003, %v991
        %1009 = vst.msk [vmem:[#allocation3 + $0x28] sm:$0xff] %vm1003, %v992
        %1010 = vst.msk [vmem:[#allocation3 + $0x30] sm:$0xff] %vm1003, %v993
        %1011 = vst.msk [vmem:[#allocation3 + $0x38] sm:$0xff] %vm1003, %v994
        %1012 = vst.msk [vmem:[#allocation3 + $0x40] sm:$0xff] %vm1003, %v995
        %1013 = vst.msk [vmem:[#allocation3 + $0x48] sm:$0xff] %vm1003, %v996
        %1014 = vst.msk [vmem:[#allocation3 + $0x50] sm:$0xff] %vm1003, %v997
        %1015 = vst.msk [vmem:[#allocation3 + $0x58] sm:$0xff] %vm1003, %v998
        %1016 = vst.msk [vmem:[#allocation3 + $0x60] sm:$0xff] %vm1003, %v999
        %1017 = vst.msk [vmem:[#allocation3 + $0x68] sm:$0xff] %vm1003, %v1000
        %1018 = vst.msk [vmem:[#allocation3 + $0x70] sm:$0xff] %vm1003, %v1001
        %1019 = vst.msk [vmem:[#allocation3 + $0x78] sm:$0xff] %vm1003, %v1002
        %v1020 = vld [vmem:[#allocation4] sm:$0xff]
        %v1021 = vld [vmem:[#allocation4 + $0x8] sm:$0xff]
        %v1022 = vld [vmem:[#allocation4 + $0x10] sm:$0xff]
        %v1023 = vld [vmem:[#allocation4 + $0x18] sm:$0xff]
        %v1024 = vld [vmem:[#allocation4 + $0x20] sm:$0xff]
        %v1025 = vld [vmem:[#allocation4 + $0x28] sm:$0xff]
        %v1026 = vld [vmem:[#allocation4 + $0x30] sm:$0xff]
        %v1027 = vld [vmem:[#allocation4 + $0x38] sm:$0xff]
        %v1028 = vld [vmem:[#allocation4 + $0x40] sm:$0xff]
        %v1029 = vld [vmem:[#allocation4 + $0x48] sm:$0xff]
        %v1030 = vld [vmem:[#allocation4 + $0x50] sm:$0xff]
        %v1031 = vld [vmem:[#allocation4 + $0x58] sm:$0xff]
        %v1032 = vld [vmem:[#allocation4 + $0x60] sm:$0xff]
        %v1033 = vld [vmem:[#allocation4 + $0x68] sm:$0xff]
        %v1034 = vld [vmem:[#allocation4 + $0x70] sm:$0xff]
        %v1035 = vld [vmem:[#allocation4 + $0x78] sm:$0xff]
        %1037 = vset.pattern.permute.xlu0 0
        %1038 = vperm.xlu0 %1037, %v892
        %v1039 = vpop.permute.xlu0 %1038
        %1042 = vset.pattern.permute.xlu0 0
        %1043 = vperm.xlu0 %1042, %v894
        %v1044 = vpop.permute.xlu0 %1043
        %1047 = vset.pattern.permute.xlu0 0
        %1048 = vperm.xlu0 %1047, %v896
        %v1049 = vpop.permute.xlu0 %1048
        %1052 = vset.pattern.permute.xlu0 0
        %1053 = vperm.xlu0 %1052, %v898
        %v1054 = vpop.permute.xlu0 %1053
        %1057 = vset.pattern.permute.xlu0 0
        %1058 = vperm.xlu0 %1057, %v900
        %v1059 = vpop.permute.xlu0 %1058
        %1062 = vset.pattern.permute.xlu0 0
        %1063 = vperm.xlu0 %1062, %v902
        %v1064 = vpop.permute.xlu0 %1063
        %1067 = vset.pattern.permute.xlu0 0
        %1068 = vperm.xlu0 %1067, %v904
        %v1069 = vpop.permute.xlu0 %1068
        %1072 = vset.pattern.permute.xlu0 0
        %1073 = vperm.xlu0 %1072, %v906
        %v1074 = vpop.permute.xlu0 %1073
        %1077 = vset.pattern.permute.xlu0 0
        %1078 = vperm.xlu0 %1077, %v908
        %v1079 = vpop.permute.xlu0 %1078
        %1082 = vset.pattern.permute.xlu0 0
        %1083 = vperm.xlu0 %1082, %v910
        %v1084 = vpop.permute.xlu0 %1083
        %1087 = vset.pattern.permute.xlu0 0
        %1088 = vperm.xlu0 %1087, %v912
        %v1089 = vpop.permute.xlu0 %1088
        %1092 = vset.pattern.permute.xlu0 0
        %1093 = vperm.xlu0 %1092, %v914
        %v1094 = vpop.permute.xlu0 %1093
        %1097 = vset.pattern.permute.xlu0 0
        %1098 = vperm.xlu0 %1097, %v916
        %v1099 = vpop.permute.xlu0 %1098
        %1102 = vset.pattern.permute.xlu0 0
        %1103 = vperm.xlu0 %1102, %v918
        %v1104 = vpop.permute.xlu0 %1103
        %1107 = vset.pattern.permute.xlu0 0
        %1108 = vperm.xlu0 %1107, %v920
        %v1109 = vpop.permute.xlu0 %1108
        %1112 = vset.pattern.permute.xlu0 0
        %1113 = vperm.xlu0 %1112, %v922
        %v1114 = vpop.permute.xlu0 %1113
        %v1116 = vmul.f32 %v1039, %v1020
        %v1117 = vmul.f32 %v1044, %v1021
        %v1118 = vmul.f32 %v1049, %v1022
        %v1119 = vmul.f32 %v1054, %v1023
        %v1120 = vmul.f32 %v1059, %v1024
        %v1121 = vmul.f32 %v1064, %v1025
        %v1122 = vmul.f32 %v1069, %v1026
        %v1123 = vmul.f32 %v1074, %v1027
        %v1124 = vmul.f32 %v1079, %v1028
        %v1125 = vmul.f32 %v1084, %v1029
        %v1126 = vmul.f32 %v1089, %v1030
        %v1127 = vmul.f32 %v1094, %v1031
        %v1128 = vmul.f32 %v1099, %v1032
        %v1129 = vmul.f32 %v1104, %v1033
        %v1130 = vmul.f32 %v1109, %v1034
        %v1131 = vmul.f32 %v1114, %v1035
        %v1132 = vpack.c.bf16 %v846, %v844
        %v1133 = vpack.c.bf16 %v850, %v848
        %v1134 = vpack.c.bf16 %v854, %v852
        %v1135 = vpack.c.bf16 %v858, %v856
        %v1136 = vpack.c.bf16 %v862, %v860
        %v1137 = vpack.c.bf16 %v866, %v864
        %v1138 = vpack.c.bf16 %v870, %v868
        %v1139 = vpack.c.bf16 %v874, %v872
        %v1156 = vunpack.c.l.b16 %v499
        %v1157 = vunpack.c.l.b16 %v500
        %v1158 = vunpack.c.l.b16 %v501
        %v1159 = vunpack.c.l.b16 %v502
        %v1160 = vunpack.c.l.b16 %v503
        %v1161 = vunpack.c.l.b16 %v504
        %v1162 = vunpack.c.l.b16 %v505
        %v1163 = vunpack.c.l.b16 %v506
        %v1164 = vunpack.c.l.b16 %v507
        %v1165 = vunpack.c.l.b16 %v508
        %v1166 = vunpack.c.l.b16 %v509
        %v1167 = vunpack.c.l.b16 %v510
        %v1168 = vunpack.c.l.b16 %v511
        %v1169 = vunpack.c.l.b16 %v512
        %v1170 = vunpack.c.l.b16 %v513
        %v1171 = vunpack.c.l.b16 %v514
        %v1172 = vpack.c.b16 %v1157, %v1156
        %v1173 = vpack.c.b16 %v1159, %v1158
        %v1174 = vpack.c.b16 %v1161, %v1160
        %v1175 = vpack.c.b16 %v1163, %v1162
        %v1176 = vpack.c.b16 %v1165, %v1164
        %v1177 = vpack.c.b16 %v1167, %v1166
        %v1178 = vpack.c.b16 %v1169, %v1168
        %v1179 = vpack.c.b16 %v1171, %v1170
        %1188 = vmatprep.subr.bf16.mxu0 0
        %1189 = vmatpush1.bf16.msra.mxu0 %v1172
        %1190 = vmatprep.subr.bf16.mxu0 0
        %1191 = vmatpush1.bf16.msra.mxu0 %v1173
        %1192 = vmatprep.subr.bf16.mxu0 0
        %1193 = vmatpush1.bf16.msra.mxu0 %v1174
        %1194 = vmatprep.subr.bf16.mxu0 0
        %1195 = vmatpush1.bf16.msra.mxu0 %v1175
        %1196 = vmatprep.subr.bf16.mxu0 0
        %1197 = vmatpush1.bf16.msra.mxu0 %v1176
        %1198 = vmatprep.subr.bf16.mxu0 0
        %1199 = vmatpush1.bf16.msra.mxu0 %v1177
        %1200 = vmatprep.subr.bf16.mxu0 0
        %1201 = vmatpush1.bf16.msra.mxu0 %v1178
        %1202 = vmatprep.subr.bf16.mxu0 0
        %1203 = vmatpush1.bf16.msra.mxu0 %v1179
        %1204 = vmatprep.subr.bf16.mxu0 0
        %1205 = vmatpush1.bf16.msra.mxu0 0
        %1206 = vmatprep.subr.bf16.mxu0 0
        %1207 = vmatpush1.bf16.msra.mxu0 0
        %1208 = vmatprep.subr.bf16.mxu0 0
        %1209 = vmatpush1.bf16.msra.mxu0 0
        %1210 = vmatprep.subr.bf16.mxu0 0
        %1211 = vmatpush1.bf16.msra.mxu0 0
        %1212 = vmatprep.subr.bf16.mxu0 0
        %1213 = vmatpush1.bf16.msra.mxu0 0
        %1214 = vmatprep.subr.bf16.mxu0 0
        %1215 = vmatpush1.bf16.msra.mxu0 0
        %1216 = vmatprep.subr.bf16.mxu0 0
        %1217 = vmatpush1.bf16.msra.mxu0 0
        %1218 = vmatprep.subr.bf16.mxu0 0
        %1219 = vmatpush1.bf16.msra.mxu0 0
        %1220 = vmatprep.mubr.bf16.mxu0 0
        %1221 = vmatmul.mubr.bf16.gmra.mrb[0].mxu0 %v1132
        %v1222 = vpop.f32.mrb[0].mxu0
        %v1223 = vadd.f32 0.0, %v1222
        %v1224 = vpop.f32.mrb[0].mxu0
        %v1225 = vpop.f32.mrb[0].mxu0
        %v1226 = vadd.f32 0.0, %v1225
        %v1227 = vpop.f32.mrb[0].mxu0
        %1228 = vmatprep.mubr.bf16.mxu0 0
        %1229 = vmatmul.mubr.bf16.gmra.mrb[0].mxu0 %v1133
        %v1230 = vpop.f32.mrb[0].mxu0
        %v1231 = vadd.f32 0.0, %v1230
        %v1232 = vpop.f32.mrb[0].mxu0
        %v1233 = vpop.f32.mrb[0].mxu0
        %v1234 = vadd.f32 0.0, %v1233
        %v1235 = vpop.f32.mrb[0].mxu0
        %1236 = vmatprep.mubr.bf16.mxu0 0
        %1237 = vmatmul.mubr.bf16.gmra.mrb[0].mxu0 %v1134
        %v1238 = vpop.f32.mrb[0].mxu0
        %v1239 = vadd.f32 0.0, %v1238
        %v1240 = vpop.f32.mrb[0].mxu0
        %v1241 = vpop.f32.mrb[0].mxu0
        %v1242 = vadd.f32 0.0, %v1241
        %v1243 = vpop.f32.mrb[0].mxu0
        %1244 = vmatprep.mubr.bf16.mxu0 0
        %1245 = vmatmul.mubr.bf16.gmra.mrb[0].mxu0 %v1135
        %v1246 = vpop.f32.mrb[0].mxu0
        %v1247 = vadd.f32 0.0, %v1246
        %v1248 = vpop.f32.mrb[0].mxu0
        %v1249 = vpop.f32.mrb[0].mxu0
        %v1250 = vadd.f32 0.0, %v1249
        %v1251 = vpop.f32.mrb[0].mxu0
        %1252 = vmatprep.mubr.bf16.mxu0 0
        %1253 = vmatmul.mubr.bf16.gmra.mrb[0].mxu0 %v1136
        %v1254 = vpop.f32.mrb[0].mxu0
        %v1255 = vadd.f32 0.0, %v1254
        %v1256 = vpop.f32.mrb[0].mxu0
        %v1257 = vpop.f32.mrb[0].mxu0
        %v1258 = vadd.f32 0.0, %v1257
        %v1259 = vpop.f32.mrb[0].mxu0
        %1260 = vmatprep.mubr.bf16.mxu0 0
        %1261 = vmatmul.mubr.bf16.gmra.mrb[0].mxu0 %v1137
        %v1262 = vpop.f32.mrb[0].mxu0
        %v1263 = vadd.f32 0.0, %v1262
        %v1264 = vpop.f32.mrb[0].mxu0
        %v1265 = vpop.f32.mrb[0].mxu0
        %v1266 = vadd.f32 0.0, %v1265
        %v1267 = vpop.f32.mrb[0].mxu0
        %1268 = vmatprep.mubr.bf16.mxu0 0
        %1269 = vmatmul.mubr.bf16.gmra.mrb[0].mxu0 %v1138
        %v1270 = vpop.f32.mrb[0].mxu0
        %v1271 = vadd.f32 0.0, %v1270
        %v1272 = vpop.f32.mrb[0].mxu0
        %v1273 = vpop.f32.mrb[0].mxu0
        %v1274 = vadd.f32 0.0, %v1273
        %v1275 = vpop.f32.mrb[0].mxu0
        %1276 = vmatprep.mubr.bf16.mxu0 0
        %1277 = vmatmul.mubr.bf16.gmra.mrb[0].mxu0 %v1139
        %v1278 = vpop.f32.mrb[0].mxu0
        %v1279 = vadd.f32 0.0, %v1278
        %v1280 = vpop.f32.mrb[0].mxu0
        %v1281 = vpop.f32.mrb[0].mxu0
        %v1282 = vadd.f32 0.0, %v1281
        %v1283 = vpop.f32.mrb[0].mxu0
        %1284 = vdwg.mxu0
        %v1285 = vadd.f32 %v1116, %v1223
        %v1286 = vadd.f32 %v1117, %v1226
        %v1287 = vadd.f32 %v1118, %v1231
        %v1288 = vadd.f32 %v1119, %v1234
        %v1289 = vadd.f32 %v1120, %v1239
        %v1290 = vadd.f32 %v1121, %v1242
        %v1291 = vadd.f32 %v1122, %v1247
        %v1292 = vadd.f32 %v1123, %v1250
        %v1293 = vadd.f32 %v1124, %v1255
        %v1294 = vadd.f32 %v1125, %v1258
        %v1295 = vadd.f32 %v1126, %v1263
        %v1296 = vadd.f32 %v1127, %v1266
        %v1297 = vadd.f32 %v1128, %v1271
        %v1298 = vadd.f32 %v1129, %v1274
        %v1299 = vadd.f32 %v1130, %v1279
        %v1300 = vadd.f32 %v1131, %v1282
        %1301 = vst.msk [vmem:[#allocation4] sm:$0xff] %vm561, %v1285
        %1302 = vst.msk [vmem:[#allocation4 + $0x8] sm:$0xff] %vm561, %v1286
        %1303 = vst.msk [vmem:[#allocation4 + $0x10] sm:$0xff] %vm561, %v1287
        %1304 = vst.msk [vmem:[#allocation4 + $0x18] sm:$0xff] %vm561, %v1288
        %1305 = vst.msk [vmem:[#allocation4 + $0x20] sm:$0xff] %vm561, %v1289
        %1306 = vst.msk [vmem:[#allocation4 + $0x28] sm:$0xff] %vm561, %v1290
        %1307 = vst.msk [vmem:[#allocation4 + $0x30] sm:$0xff] %vm561, %v1291
        %1308 = vst.msk [vmem:[#allocation4 + $0x38] sm:$0xff] %vm561, %v1292
        %1309 = vst.msk [vmem:[#allocation4 + $0x40] sm:$0xff] %vm561, %v1293
        %1310 = vst.msk [vmem:[#allocation4 + $0x48] sm:$0xff] %vm561, %v1294
        %1311 = vst.msk [vmem:[#allocation4 + $0x50] sm:$0xff] %vm561, %v1295
        %1312 = vst.msk [vmem:[#allocation4 + $0x58] sm:$0xff] %vm561, %v1296
        %1313 = vst.msk [vmem:[#allocation4 + $0x60] sm:$0xff] %vm561, %v1297
        %1314 = vst.msk [vmem:[#allocation4 + $0x68] sm:$0xff] %vm561, %v1298
        %1315 = vst.msk [vmem:[#allocation4 + $0x70] sm:$0xff] %vm561, %v1299
        %1316 = vst.msk [vmem:[#allocation4 + $0x78] sm:$0xff] %vm561, %v1300
        %1317 = vst.msk [vmem:[#allocation2] sm:$0xff] %vm1003, %v731
        %1318 = vst.msk [vmem:[#allocation2 + $0x8] sm:$0xff] %vm1003, %v732
        %1319 = vst.msk [vmem:[#allocation2 + $0x10] sm:$0xff] %vm1003, %v733
        %1320 = vst.msk [vmem:[#allocation2 + $0x18] sm:$0xff] %vm1003, %v734
        %1321 = vst.msk [vmem:[#allocation2 + $0x20] sm:$0xff] %vm1003, %v735
        %1322 = vst.msk [vmem:[#allocation2 + $0x28] sm:$0xff] %vm1003, %v736
        %1323 = vst.msk [vmem:[#allocation2 + $0x30] sm:$0xff] %vm1003, %v737
        %1324 = vst.msk [vmem:[#allocation2 + $0x38] sm:$0xff] %vm1003, %v738
        %1325 = vst.msk [vmem:[#allocation2 + $0x40] sm:$0xff] %vm1003, %v739
        %1326 = vst.msk [vmem:[#allocation2 + $0x48] sm:$0xff] %vm1003, %v740
        %1327 = vst.msk [vmem:[#allocation2 + $0x50] sm:$0xff] %vm1003, %v741
        %1328 = vst.msk [vmem:[#allocation2 + $0x58] sm:$0xff] %vm1003, %v742
        %1329 = vst.msk [vmem:[#allocation2 + $0x60] sm:$0xff] %vm1003, %v743
        %1330 = vst.msk [vmem:[#allocation2 + $0x68] sm:$0xff] %vm1003, %v744
        %1331 = vst.msk [vmem:[#allocation2 + $0x70] sm:$0xff] %vm1003, %v745
        %1332 = vst.msk [vmem:[#allocation2 + $0x78] sm:$0xff] %vm1003, %v746
        %p1333 = scmp.eq.s32.totalorder %s28, 1
        // Predicated region
        $region90: #{tpu_custom_call.1} parent=76 // pred_check
          %p1334 = pneg %p1333
        $region91: #{tpu_custom_call.1} parent=76 // pred_check_branch
          %1336 = sbr.rel (%p1334) target = $region93
        $region92: #{tpu_custom_call.1} parent=76 // pred_region
          %v1337 = vld [vmem:[#allocation4] sm:$0xff]
          %v1338 = vld [vmem:[#allocation4 + $0x8] sm:$0xff]
          %v1339 = vld [vmem:[#allocation4 + $0x10] sm:$0xff]
          %v1340 = vld [vmem:[#allocation4 + $0x18] sm:$0xff]
          %v1341 = vld [vmem:[#allocation4 + $0x20] sm:$0xff]
          %v1342 = vld [vmem:[#allocation4 + $0x28] sm:$0xff]
          %v1343 = vld [vmem:[#allocation4 + $0x30] sm:$0xff]
          %v1344 = vld [vmem:[#allocation4 + $0x38] sm:$0xff]
          %v1345 = vld [vmem:[#allocation4 + $0x40] sm:$0xff]
          %v1346 = vld [vmem:[#allocation4 + $0x48] sm:$0xff]
          %v1347 = vld [vmem:[#allocation4 + $0x50] sm:$0xff]
          %v1348 = vld [vmem:[#allocation4 + $0x58] sm:$0xff]
          %v1349 = vld [vmem:[#allocation4 + $0x60] sm:$0xff]
          %v1350 = vld [vmem:[#allocation4 + $0x68] sm:$0xff]
          %v1351 = vld [vmem:[#allocation4 + $0x70] sm:$0xff]
          %v1352 = vld [vmem:[#allocation4 + $0x78] sm:$0xff]
          %v1353 = vld [vmem:[#allocation3] sm:$0xff]
          %v1354 = vld [vmem:[#allocation3 + $0x8] sm:$0xff]
          %v1355 = vld [vmem:[#allocation3 + $0x10] sm:$0xff]
          %v1356 = vld [vmem:[#allocation3 + $0x18] sm:$0xff]
          %v1357 = vld [vmem:[#allocation3 + $0x20] sm:$0xff]
          %v1358 = vld [vmem:[#allocation3 + $0x28] sm:$0xff]
          %v1359 = vld [vmem:[#allocation3 + $0x30] sm:$0xff]
          %v1360 = vld [vmem:[#allocation3 + $0x38] sm:$0xff]
          %v1361 = vld [vmem:[#allocation3 + $0x40] sm:$0xff]
          %v1362 = vld [vmem:[#allocation3 + $0x48] sm:$0xff]
          %v1363 = vld [vmem:[#allocation3 + $0x50] sm:$0xff]
          %v1364 = vld [vmem:[#allocation3 + $0x58] sm:$0xff]
          %v1365 = vld [vmem:[#allocation3 + $0x60] sm:$0xff]
          %v1366 = vld [vmem:[#allocation3 + $0x68] sm:$0xff]
          %v1367 = vld [vmem:[#allocation3 + $0x70] sm:$0xff]
          %v1368 = vld [vmem:[#allocation3 + $0x78] sm:$0xff]
          %1370 = vset.pattern.permute.xlu0 0
          %1371 = vperm.xlu0 %1370, %v1353
          %v1372 = vpop.permute.xlu0 %1371
          %1375 = vset.pattern.permute.xlu0 0
          %1376 = vperm.xlu0 %1375, %v1354
          %v1377 = vpop.permute.xlu0 %1376
          %1380 = vset.pattern.permute.xlu0 0
          %1381 = vperm.xlu0 %1380, %v1355
          %v1382 = vpop.permute.xlu0 %1381
          %1385 = vset.pattern.permute.xlu0 0
          %1386 = vperm.xlu0 %1385, %v1356
          %v1387 = vpop.permute.xlu0 %1386
          %1390 = vset.pattern.permute.xlu0 0
          %1391 = vperm.xlu0 %1390, %v1357
          %v1392 = vpop.permute.xlu0 %1391
          %1395 = vset.pattern.permute.xlu0 0
          %1396 = vperm.xlu0 %1395, %v1358
          %v1397 = vpop.permute.xlu0 %1396
          %1400 = vset.pattern.permute.xlu0 0
          %1401 = vperm.xlu0 %1400, %v1359
          %v1402 = vpop.permute.xlu0 %1401
          %1405 = vset.pattern.permute.xlu0 0
          %1406 = vperm.xlu0 %1405, %v1360
          %v1407 = vpop.permute.xlu0 %1406
          %1410 = vset.pattern.permute.xlu0 0
          %1411 = vperm.xlu0 %1410, %v1361
          %v1412 = vpop.permute.xlu0 %1411
          %1415 = vset.pattern.permute.xlu0 0
          %1416 = vperm.xlu0 %1415, %v1362
          %v1417 = vpop.permute.xlu0 %1416
          %1420 = vset.pattern.permute.xlu0 0
          %1421 = vperm.xlu0 %1420, %v1363
          %v1422 = vpop.permute.xlu0 %1421
          %1425 = vset.pattern.permute.xlu0 0
          %1426 = vperm.xlu0 %1425, %v1364
          %v1427 = vpop.permute.xlu0 %1426
          %1430 = vset.pattern.permute.xlu0 0
          %1431 = vperm.xlu0 %1430, %v1365
          %v1432 = vpop.permute.xlu0 %1431
          %1435 = vset.pattern.permute.xlu0 0
          %1436 = vperm.xlu0 %1435, %v1366
          %v1437 = vpop.permute.xlu0 %1436
          %1440 = vset.pattern.permute.xlu0 0
          %1441 = vperm.xlu0 %1440, %v1367
          %v1442 = vpop.permute.xlu0 %1441
          %1445 = vset.pattern.permute.xlu0 0
          %1446 = vperm.xlu0 %1445, %v1368
          %v1447 = vpop.permute.xlu0 %1446
          %v1449 = vrcp.pop %v1372
          %v1450 = vmul.f32 %v1337, %v1449
          %v1451 = vrcp.pop %v1377
          %v1452 = vmul.f32 %v1338, %v1451
          %v1453 = vrcp.pop %v1382
          %v1454 = vmul.f32 %v1339, %v1453
          %v1455 = vrcp.pop %v1387
          %v1456 = vmul.f32 %v1340, %v1455
          %v1457 = vrcp.pop %v1392
          %v1458 = vmul.f32 %v1341, %v1457
          %v1459 = vrcp.pop %v1397
          %v1460 = vmul.f32 %v1342, %v1459
          %v1461 = vrcp.pop %v1402
          %v1462 = vmul.f32 %v1343, %v1461
          %v1463 = vrcp.pop %v1407
          %v1464 = vmul.f32 %v1344, %v1463
          %v1465 = vrcp.pop %v1412
          %v1466 = vmul.f32 %v1345, %v1465
          %v1467 = vrcp.pop %v1417
          %v1468 = vmul.f32 %v1346, %v1467
          %v1469 = vrcp.pop %v1422
          %v1470 = vmul.f32 %v1347, %v1469
          %v1471 = vrcp.pop %v1427
          %v1472 = vmul.f32 %v1348, %v1471
          %v1473 = vrcp.pop %v1432
          %v1474 = vmul.f32 %v1349, %v1473
          %v1475 = vrcp.pop %v1437
          %v1476 = vmul.f32 %v1350, %v1475
          %v1477 = vrcp.pop %v1442
          %v1478 = vmul.f32 %v1351, %v1477
          %v1479 = vrcp.pop %v1447
          %v1480 = vmul.f32 %v1352, %v1479
          %v1481 = vld [vmem:[#allocation5] sm:$0xff]
          %v1482 = vld [vmem:[#allocation5 + $0x8] sm:$0xff]
          %v1483 = vld [vmem:[#allocation5 + $0x10] sm:$0xff]
          %v1484 = vld [vmem:[#allocation5 + $0x18] sm:$0xff]
          %v1485 = vld [vmem:[#allocation5 + $0x20] sm:$0xff]
          %v1486 = vld [vmem:[#allocation5 + $0x28] sm:$0xff]
          %v1487 = vld [vmem:[#allocation5 + $0x30] sm:$0xff]
          %v1488 = vld [vmem:[#allocation5 + $0x38] sm:$0xff]
          %v1489 = vld [vmem:[#allocation5 + $0x40] sm:$0xff]
          %v1490 = vld [vmem:[#allocation5 + $0x48] sm:$0xff]
          %v1491 = vld [vmem:[#allocation5 + $0x50] sm:$0xff]
          %v1492 = vld [vmem:[#allocation5 + $0x58] sm:$0xff]
          %v1493 = vld [vmem:[#allocation5 + $0x60] sm:$0xff]
          %v1494 = vld [vmem:[#allocation5 + $0x68] sm:$0xff]
          %v1495 = vld [vmem:[#allocation5 + $0x70] sm:$0xff]
          %v1496 = vld [vmem:[#allocation5 + $0x78] sm:$0xff]
          %v1497 = vpack.c.bf16 %v1452, %v1450
          %v1498 = vpack.c.bf16 %v1456, %v1454
          %v1499 = vpack.c.bf16 %v1460, %v1458
          %v1500 = vpack.c.bf16 %v1464, %v1462
          %v1501 = vpack.c.bf16 %v1468, %v1466
          %v1502 = vpack.c.bf16 %v1472, %v1470
          %v1503 = vpack.c.bf16 %v1476, %v1474
          %v1504 = vpack.c.bf16 %v1480, %v1478
          %s1505 = smul.u32 %s27, 2
          %s1506 = smul.addr %s1505, 4
          %s1507 = scalar_lea.vmem %s3, %s1506
          %v1508 = vld [vmem:[%s1507] sm:$0xf]
          %v1509 = vld [vmem:[%s1507 + $0x4] sm:$0xf]
          %v1512 = vunpack.c.l.b16 %v1508
          %v1513 = vunpack.c.l.b16 %v1509
          %v1514 = vpack.c.b16 %v1513, %v1512
          %v1517 = vsel %vm561, %v1497, 0
          %v1520 = vsel %vm561, %v1498, 0
          %v1523 = vsel %vm561, %v1499, 0
          %v1526 = vsel %vm561, %v1500, 0
          %v1529 = vsel %vm561, %v1501, 0
          %v1532 = vsel %vm561, %v1502, 0
          %v1535 = vsel %vm561, %v1503, 0
          %v1538 = vsel %vm561, %v1504, 0
          %1540 = vmatprep.subr.bf16.mxu0 0
          %1541 = vmatpush1.bf16.msra.mxu0 %v1514
          %1542 = vmatprep.subr.bf16.mxu0 0
          %1543 = vmatpush1.bf16.msra.mxu0 0
          %1544 = vmatprep.subr.bf16.mxu0 0
          %1545 = vmatpush1.bf16.msra.mxu0 0
          %1546 = vmatprep.subr.bf16.mxu0 0
          %1547 = vmatpush1.bf16.msra.mxu0 0
          %1548 = vmatprep.subr.bf16.mxu0 0
          %1549 = vmatpush1.bf16.msra.mxu0 0
          %1550 = vmatprep.subr.bf16.mxu0 0
          %1551 = vmatpush1.bf16.msra.mxu0 0
          %1552 = vmatprep.subr.bf16.mxu0 0
          %1553 = vmatpush1.bf16.msra.mxu0 0
          %1554 = vmatprep.subr.bf16.mxu0 0
          %1555 = vmatpush1.bf16.msra.mxu0 0
          %1556 = vmatprep.subr.bf16.mxu0 0
          %1557 = vmatpush1.bf16.msra.mxu0 0
          %1558 = vmatprep.subr.bf16.mxu0 0
          %1559 = vmatpush1.bf16.msra.mxu0 0
          %1560 = vmatprep.subr.bf16.mxu0 0
          %1561 = vmatpush1.bf16.msra.mxu0 0
          %1562 = vmatprep.subr.bf16.mxu0 0
          %1563 = vmatpush1.bf16.msra.mxu0 0
          %1564 = vmatprep.subr.bf16.mxu0 0
          %1565 = vmatpush1.bf16.msra.mxu0 0
          %1566 = vmatprep.subr.bf16.mxu0 0
          %1567 = vmatpush1.bf16.msra.mxu0 0
          %1568 = vmatprep.subr.bf16.mxu0 0
          %1569 = vmatpush1.bf16.msra.mxu0 0
          %1570 = vmatprep.subr.bf16.mxu0 0
          %1571 = vmatpush1.bf16.msra.mxu0 0
          %1572 = vmatprep.mubr.bf16.mxu0 0
          %1573 = vmatmul.mubr.bf16.gmra.mrb[0].mxu0 %v1517
          %v1574 = vpop.f32.mrb[0].mxu0
          %v1575 = vadd.f32 0.0, %v1574
          %v1576 = vpop.f32.mrb[0].mxu0
          %v1577 = vpop.f32.mrb[0].mxu0
          %v1578 = vadd.f32 0.0, %v1577
          %v1579 = vpop.f32.mrb[0].mxu0
          %1580 = vmatprep.mubr.bf16.mxu0 0
          %1581 = vmatmul.mubr.bf16.gmra.mrb[0].mxu0 %v1520
          %v1582 = vpop.f32.mrb[0].mxu0
          %v1583 = vadd.f32 0.0, %v1582
          %v1584 = vpop.f32.mrb[0].mxu0
          %v1585 = vpop.f32.mrb[0].mxu0
          %v1586 = vadd.f32 0.0, %v1585
          %v1587 = vpop.f32.mrb[0].mxu0
          %1588 = vmatprep.mubr.bf16.mxu0 0
          %1589 = vmatmul.mubr.bf16.gmra.mrb[0].mxu0 %v1523
          %v1590 = vpop.f32.mrb[0].mxu0
          %v1591 = vadd.f32 0.0, %v1590
          %v1592 = vpop.f32.mrb[0].mxu0
          %v1593 = vpop.f32.mrb[0].mxu0
          %v1594 = vadd.f32 0.0, %v1593
          %v1595 = vpop.f32.mrb[0].mxu0
          %1596 = vmatprep.mubr.bf16.mxu0 0
          %1597 = vmatmul.mubr.bf16.gmra.mrb[0].mxu0 %v1526
          %v1598 = vpop.f32.mrb[0].mxu0
          %v1599 = vadd.f32 0.0, %v1598
          %v1600 = vpop.f32.mrb[0].mxu0
          %v1601 = vpop.f32.mrb[0].mxu0
          %v1602 = vadd.f32 0.0, %v1601
          %v1603 = vpop.f32.mrb[0].mxu0
          %1604 = vmatprep.mubr.bf16.mxu0 0
          %1605 = vmatmul.mubr.bf16.gmra.mrb[0].mxu0 %v1529
          %v1606 = vpop.f32.mrb[0].mxu0
          %v1607 = vadd.f32 0.0, %v1606
          %v1608 = vpop.f32.mrb[0].mxu0
          %v1609 = vpop.f32.mrb[0].mxu0
          %v1610 = vadd.f32 0.0, %v1609
          %v1611 = vpop.f32.mrb[0].mxu0
          %1612 = vmatprep.mubr.bf16.mxu0 0
          %1613 = vmatmul.mubr.bf16.gmra.mrb[0].mxu0 %v1532
          %v1614 = vpop.f32.mrb[0].mxu0
          %v1615 = vadd.f32 0.0, %v1614
          %v1616 = vpop.f32.mrb[0].mxu0
          %v1617 = vpop.f32.mrb[0].mxu0
          %v1618 = vadd.f32 0.0, %v1617
          %v1619 = vpop.f32.mrb[0].mxu0
          %1620 = vmatprep.mubr.bf16.mxu0 0
          %1621 = vmatmul.mubr.bf16.gmra.mrb[0].mxu0 %v1535
          %v1622 = vpop.f32.mrb[0].mxu0
          %v1623 = vadd.f32 0.0, %v1622
          %v1624 = vpop.f32.mrb[0].mxu0
          %v1625 = vpop.f32.mrb[0].mxu0
          %v1626 = vadd.f32 0.0, %v1625
          %v1627 = vpop.f32.mrb[0].mxu0
          %1628 = vmatprep.mubr.bf16.mxu0 0
          %1629 = vmatmul.mubr.bf16.gmra.mrb[0].mxu0 %v1538
          %v1630 = vpop.f32.mrb[0].mxu0
          %v1631 = vadd.f32 0.0, %v1630
          %v1632 = vpop.f32.mrb[0].mxu0
          %v1633 = vpop.f32.mrb[0].mxu0
          %v1634 = vadd.f32 0.0, %v1633
          %v1635 = vpop.f32.mrb[0].mxu0
          %1636 = vdwg.mxu0
          %v1637 = vadd.f32 %v1481, %v1575
          %v1638 = vadd.f32 %v1482, %v1578
          %v1639 = vadd.f32 %v1483, %v1583
          %v1640 = vadd.f32 %v1484, %v1586
          %v1641 = vadd.f32 %v1485, %v1591
          %v1642 = vadd.f32 %v1486, %v1594
          %v1643 = vadd.f32 %v1487, %v1599
          %v1644 = vadd.f32 %v1488, %v1602
          %v1645 = vadd.f32 %v1489, %v1607
          %v1646 = vadd.f32 %v1490, %v1610
          %v1647 = vadd.f32 %v1491, %v1615
          %v1648 = vadd.f32 %v1492, %v1618
          %v1649 = vadd.f32 %v1493, %v1623
          %v1650 = vadd.f32 %v1494, %v1626
          %v1651 = vadd.f32 %v1495, %v1631
          %v1652 = vadd.f32 %v1496, %v1634
          %1653 = vst [vmem:[#allocation5] sm:$0xff] %v1637
          %1654 = vst [vmem:[#allocation5 + $0x8] sm:$0xff] %v1638
          %1655 = vst [vmem:[#allocation5 + $0x10] sm:$0xff] %v1639
          %1656 = vst [vmem:[#allocation5 + $0x18] sm:$0xff] %v1640
          %1657 = vst [vmem:[#allocation5 + $0x20] sm:$0xff] %v1641
          %1658 = vst [vmem:[#allocation5 + $0x28] sm:$0xff] %v1642
          %1659 = vst [vmem:[#allocation5 + $0x30] sm:$0xff] %v1643
          %1660 = vst [vmem:[#allocation5 + $0x38] sm:$0xff] %v1644
          %1661 = vst [vmem:[#allocation5 + $0x40] sm:$0xff] %v1645
          %1662 = vst [vmem:[#allocation5 + $0x48] sm:$0xff] %v1646
          %1663 = vst [vmem:[#allocation5 + $0x50] sm:$0xff] %v1647
          %1664 = vst [vmem:[#allocation5 + $0x58] sm:$0xff] %v1648
          %1665 = vst [vmem:[#allocation5 + $0x60] sm:$0xff] %v1649
          %1666 = vst [vmem:[#allocation5 + $0x68] sm:$0xff] %v1650
          %1667 = vst [vmem:[#allocation5 + $0x70] sm:$0xff] %v1651
          %1668 = vst [vmem:[#allocation5 + $0x78] sm:$0xff] %v1652
        $region93: #{tpu_custom_call.1} parent=76 // pred_fallthru
          _
        %p1669 = scmp.eq.s32.totalorder %s27, 1
        %p1670 = pnand %p1333, %p1669
        %p1671 = pneg %p1670
        // Predicated region
        $region94: #{tpu_custom_call.1} parent=76 // pred_check
          _
        $region95: #{tpu_custom_call.1} parent=76 // pred_check_branch
          %1673 = sbr.rel (%p1670) target = $region97
        $region96: #{tpu_custom_call.1} parent=76 // pred_region
          %v1674 = vld [vmem:[#allocation5] sm:$0xff]
          %v1675 = vld [vmem:[#allocation5 + $0x8] sm:$0xff]
          %v1676 = vld [vmem:[#allocation5 + $0x10] sm:$0xff]
          %v1677 = vld [vmem:[#allocation5 + $0x18] sm:$0xff]
          %v1678 = vld [vmem:[#allocation5 + $0x20] sm:$0xff]
          %v1679 = vld [vmem:[#allocation5 + $0x28] sm:$0xff]
          %v1680 = vld [vmem:[#allocation5 + $0x30] sm:$0xff]
          %v1681 = vld [vmem:[#allocation5 + $0x38] sm:$0xff]
          %v1682 = vld [vmem:[#allocation5 + $0x40] sm:$0xff]
          %v1683 = vld [vmem:[#allocation5 + $0x48] sm:$0xff]
          %v1684 = vld [vmem:[#allocation5 + $0x50] sm:$0xff]
          %v1685 = vld [vmem:[#allocation5 + $0x58] sm:$0xff]
          %v1686 = vld [vmem:[#allocation5 + $0x60] sm:$0xff]
          %v1687 = vld [vmem:[#allocation5 + $0x68] sm:$0xff]
          %v1688 = vld [vmem:[#allocation5 + $0x70] sm:$0xff]
          %v1689 = vld [vmem:[#allocation5 + $0x78] sm:$0xff]
          %v1690 = vld [vmem:[%s4] sm:$0x1]
          %v1692 = vlaneseq
          %v1693 = vshrl.u32 %v1692, 7
          %v1694 = vsub.s32 0, %v1693
          %v1695 = vrot.slane %v1690, %v1694
          %v1697 = vadd.f32 %v1674, %v1695
          %v1698 = vadd.f32 %v1675, %v1695
          %v1699 = vadd.f32 %v1676, %v1695
          %v1700 = vadd.f32 %v1677, %v1695
          %v1701 = vadd.f32 %v1678, %v1695
          %v1702 = vadd.f32 %v1679, %v1695
          %v1703 = vadd.f32 %v1680, %v1695
          %v1704 = vadd.f32 %v1681, %v1695
          %v1705 = vadd.f32 %v1682, %v1695
          %v1706 = vadd.f32 %v1683, %v1695
          %v1707 = vadd.f32 %v1684, %v1695
          %v1708 = vadd.f32 %v1685, %v1695
          %v1709 = vadd.f32 %v1686, %v1695
          %v1710 = vadd.f32 %v1687, %v1695
          %v1711 = vadd.f32 %v1688, %v1695
          %v1712 = vadd.f32 %v1689, %v1695
          %1713 = vst [vmem:[%s375] sm:$0xff] %v1697
          %1714 = vst [vmem:[%s375 + $0x8] sm:$0xff] %v1698
          %1715 = vst [vmem:[%s375 + $0x10] sm:$0xff] %v1699
          %1716 = vst [vmem:[%s375 + $0x18] sm:$0xff] %v1700
          %1717 = vst [vmem:[%s375 + $0x20] sm:$0xff] %v1701
          %1718 = vst [vmem:[%s375 + $0x28] sm:$0xff] %v1702
          %1719 = vst [vmem:[%s375 + $0x30] sm:$0xff] %v1703
          %1720 = vst [vmem:[%s375 + $0x38] sm:$0xff] %v1704
          %1721 = vst [vmem:[%s375 + $0x40] sm:$0xff] %v1705
          %1722 = vst [vmem:[%s375 + $0x48] sm:$0xff] %v1706
          %1723 = vst [vmem:[%s375 + $0x50] sm:$0xff] %v1707
          %1724 = vst [vmem:[%s375 + $0x58] sm:$0xff] %v1708
          %1725 = vst [vmem:[%s375 + $0x60] sm:$0xff] %v1709
          %1726 = vst [vmem:[%s375 + $0x68] sm:$0xff] %v1710
          %1727 = vst [vmem:[%s375 + $0x70] sm:$0xff] %v1711
          %1728 = vst [vmem:[%s375 + $0x78] sm:$0xff] %v1712
        $region97: #{tpu_custom_call.1} parent=76 // pred_fallthru
          _
        %s1729 = sand.u32 %s187, 1
        %s1730 = scalar_lea.sflag [#allocation8], %s1729
        %s1731 = sand.u32 %s187, 1
        %s1732 = smul.addr %s1731, 128
        %s1733 = scalar_lea.vmem [#allocation7], %s1732
        // Predicated region
        $region98: #{tpu_custom_call.1} parent=76 // pred_check
          %p1734 = pneg %p197
        $region99: #{tpu_custom_call.1} parent=76 // pred_check_branch
          %1736 = sbr.rel (%p1734) target = $region101
        $region100: #{tpu_custom_call.1} parent=76 // pred_region
          %s1737 = smul.u32 16, %s26
          %s1739 = ssub.s32 2048, 2048
          %1740 = vsyncadd %s1730, %s1739
          %s1741 = smul.addr %s25, 32
          %s1742 = sadd.s32 %s1737, %s1741
          %s1743 = smul.addr %s1742, 128
          %s1744 = scalar_lea.hbm %s5, %s1743
          %s1745 = sshll.u32 %s1733, 4
          %s1746 = int_to_ptr.vmem [resolvable:$true] %s1745
          %1751 = dma.vmem_to_hbm [thread:$0]  %s1746, 2048, %s1744, %s1730, 128, 128, 8
        $region101: #{tpu_custom_call.1} parent=76 // pred_fallthru
          _
      $region77: #{tpu_custom_call.1} parent=5 // pred_fallthru
        _
      %p1752 = scmp.le.s32.totalorder 2, %s14
      // Predicated region
      $region102: #{tpu_custom_call.1} parent=5 // pred_check
        %p1753 = pneg %p1752
      $region103: #{tpu_custom_call.1} parent=5 // pred_check_branch
        %1755 = sbr.rel (%p1753) target = $region105
      $region104: #{tpu_custom_call.1} parent=5 // pred_region
        %s1756 = ssub.s32 %s14, 2
        // Predicated region
        $region106: #{tpu_custom_call.1} parent=104 // pred_check
          %p1757 = pneg %p203
        $region107: #{tpu_custom_call.1} parent=104 // pred_check_branch
          %1759 = sbr.rel (%p1757) target = $region109
        $region108: #{tpu_custom_call.1} parent=104 // pred_region
          %s1760 = sand.u32 %s188, 1
          %s1761 = scalar_lea.sflag [#allocation8], %s1760
          %s1762 = sand.u32 %s188, 1
          %s1763 = smul.addr %s1762, 128
          %s1764 = scalar_lea.vmem [#allocation7], %s1763
          %1765 = dma.done %s1761, 2048
        $region109: #{tpu_custom_call.1} parent=104 // pred_fallthru
          _
      $region105: #{tpu_custom_call.1} parent=5 // pred_fallthru
        _
    $region6: #{tpu_custom_call.1} parent=1 // loop_footer
      %s18 = sadd.s32 1, %s14
    $region7: #{tpu_custom_call.1} parent=1 // loop_footer_branch
      %13 = sbr.rel target = $region3
    $region8: #{tpu_custom_call.1} parent=1 // loop_exit
      _
    %1766 = vsyncpa [#allocation8], 1
    %s1767 = scalar_lea.sflag [#allocation8], 1
    %1768 = vsyncpa %s1767, 1

</llo_original>
